<compile_context>
chip_gen: v7x
topology: tpu7x:2x2x1
jax: 0.10.0
libtpu: 0.0.40
codegen_flags: <defaults>
</compile_context>

<pallas_src>
import math
import functools

import jax
import jax.numpy as jnp
from jax.experimental import pallas as pl
from jax.experimental.pallas import tpu as pltpu


def _mha_kernel(x_ref, wq_ref, wk_ref, wv_ref, wo_ref, out_ref, *rest,
                head_dim, return_weights):
    """One (batch, query-tile, head-group) step.

    x_ref     : (1, S, E)        f32   tokens for batch b (resident across qt/hg)
    wq_ref    : (HG, E, G*hd)    bf16  per-group Wq^T (scale folded), resident
    wk_ref    : (HG, E, G*hd)    bf16  per-group Wk^T, resident
    wv_ref    : (HG, E, G*hd)    bf16  per-group Wv^T, resident
    wo_ref    : (HG, G*hd, E)    bf16  per-group rows of Wo^T, resident
    out_ref   : (1, tq, E)       f32   output block, accumulated over hg
    attnw_ref : (1, G, tq, S)          softmax weights (optional output)
    xbf_ref   : (n_qt, tq, E)    bf16  scratch: x cast once per batch element
    k_ref     : (HG, S, G*hd)    bf16  scratch: full K, built once per batch element
    v_ref     : (HG, S, G*hd)    bf16  scratch: full V, built once per batch element
    """
    if return_weights:
        attnw_ref = rest[0]
        xbf_ref, k_ref, v_ref = rest[1:]
    else:
        attnw_ref = None
        xbf_ref, k_ref, v_ref = rest

    qt = pl.program_id(1)
    hg = pl.program_id(2)

    n_qt, q_tile, _ = xbf_ref.shape
    num_groups, seq_len, group_width = k_ref.shape
    hd = head_dim
    G = group_width // hd

    # ---- Once per batch element: cast x to bf16, project full K and V. ----
    @pl.when(jnp.logical_and(qt == 0, hg == 0))
    def _():
        xb = x_ref[0].astype(jnp.bfloat16)                         # (S, E)
        for t in range(n_qt):                                      # static loop
            xbf_ref[t] = xb[t * q_tile:(t + 1) * q_tile, :]
        for g2 in range(num_groups):                               # static loop
            k_ref[g2] = jnp.dot(
                xb, wk_ref[g2],
                preferred_element_type=jnp.float32).astype(jnp.bfloat16)
            v_ref[g2] = jnp.dot(
                xb, wv_ref[g2],
                preferred_element_type=jnp.float32).astype(jnp.bfloat16)

    # ---- Per-step work: one query tile x one head group. ----
    x_tile = xbf_ref[qt]                                           # (tq, E) bf16
    q_g = jnp.dot(x_tile, wq_ref[hg],
                  preferred_element_type=jnp.float32).astype(jnp.bfloat16)  # (tq, G*hd)
    k_g = k_ref[hg]                                                # (S, G*hd)
    v_g = v_ref[hg]                                                # (S, G*hd)

    # Causal mask: global query row index = qt * tq + local row.
    row0 = qt * q_tile
    rows = row0 + jax.lax.broadcasted_iota(jnp.int32, (q_tile, seq_len), 0)
    cols = jax.lax.broadcasted_iota(jnp.int32, (q_tile, seq_len), 1)
    causal = cols > rows

    o_heads = []
    for g in range(G):                                             # static, unrolled
        qh = q_g[:, g * hd:(g + 1) * hd]
        kh = k_g[:, g * hd:(g + 1) * hd]
        vh = v_g[:, g * hd:(g + 1) * hd]
        # scores = q @ k^T (contract axis 1 of both operands, no explicit .T)
        s = jax.lax.dot_general(qh, kh, (((1,), (1,)), ((), ())),
                                preferred_element_type=jnp.float32)  # (tq, S)
        s = jnp.where(causal, -1e30, s)
        m = jnp.max(s, axis=-1, keepdims=True)
        e = jnp.exp(s - m)
        # Exact normalization (returned weights must sum to 1).
        p = e * (1.0 / jnp.sum(e, axis=-1, keepdims=True))
        if return_weights:
            attnw_ref[0, g] = p.astype(attnw_ref.dtype)
        # dropout p=0.0 -> identity
        o_heads.append(jnp.dot(p.astype(jnp.bfloat16), vh,
                               preferred_element_type=jnp.float32
                               ).astype(jnp.bfloat16))

    o_g = o_heads[0] if G == 1 else jnp.concatenate(o_heads, axis=-1)  # (tq, G*hd)

    # Output-projection contribution of this head group, accumulated over hg
    # (innermost reduction axis) in the resident f32 output block.
    @pl.when(hg == 0)
    def _():
        out_ref[...] = jnp.zeros_like(out_ref)

    out_ref[0] += jnp.dot(o_g, wo_ref[hg], preferred_element_type=jnp.float32)


def _auto_q_tile(seq_len):
    if seq_len <= 256:
        return seq_len
    for cand in (256, 128, 64, 32, 16, 8):
        if seq_len % cand == 0:
            return cand
    return seq_len


def _auto_heads_per_step(num_heads, head_dim):
    best = 1
    for g in range(1, num_heads + 1):
        if num_heads % g == 0 and g * head_dim <= 256:
            best = g
    return best


def multi_head_attention(x, wq, wk, wv, wo, *, num_heads, q_tile=None,
                         heads_per_step=None, return_weights=True,
                         weights_dtype=jnp.float32, vmem_limit_bytes=None):
    """Causal self multi-head attention (bias=False, dropout=0.0, eval mode).

    x           : (B, S, E) float32
    wq/wk/wv/wo : (E, E) float32, PyTorch nn.Linear layout (out_features, in_features)
    returns     : (attn_output (B,S,E) f32, attn_weights (B,H,S,S) weights_dtype)
                  or attn_output alone if return_weights=False.
    """
    B, S, E = x.shape
    hd = E // num_heads
    assert hd * num_heads == E, "emb_dim must be divisible by num_heads"

    if q_tile is None:
        q_tile = _auto_q_tile(S)
    assert S % q_tile == 0 and (q_tile == S or q_tile % 8 == 0)
    n_qt = S // q_tile

    if heads_per_step is None:
        heads_per_step = _auto_heads_per_step(num_heads, hd)
    G = heads_per_step
    assert num_heads % G == 0
    HG = num_heads // G
    gw = G * hd

    scale = 1.0 / math.sqrt(hd)

    # TODO(synk): hoist this weight repack (transpose/reshape/cast) out of the
    # hot path (do it once at parameter-load time) when weights are static.
    def to_groups(w, fold_scale=False):
        wt = jnp.transpose(w)                      # (E_in, E_out), head-major columns
        if fold_scale:
            wt = wt * scale
        return wt.reshape(E, HG, gw).transpose(1, 0, 2).astype(jnp.bfloat16)

    wq_g = to_groups(wq, fold_scale=True)                          # (HG, E, G*hd)
    wk_g = to_groups(wk)                                           # (HG, E, G*hd)
    wv_g = to_groups(wv)                                           # (HG, E, G*hd)
    wo_g = jnp.transpose(wo).reshape(HG, gw, E).astype(jnp.bfloat16)  # (HG, G*hd, E)

    kernel = functools.partial(_mha_kernel, head_dim=hd,
                               return_weights=return_weights)

    in_specs = [
        pl.BlockSpec((1, S, E), lambda b, qt, hg: (b, 0, 0)),      # x, resident per batch
        pl.BlockSpec((HG, E, gw), lambda b, qt, hg: (0, 0, 0)),    # Wq^T*scale, resident
        pl.BlockSpec((HG, E, gw), lambda b, qt, hg: (0, 0, 0)),    # Wk^T, resident
        pl.BlockSpec((HG, E, gw), lambda b, qt, hg: (0, 0, 0)),    # Wv^T, resident
        pl.BlockSpec((HG, gw, E), lambda b, qt, hg: (0, 0, 0)),    # Wo^T, resident
    ]
    out_specs = [pl.BlockSpec((1, q_tile, E), lambda b, qt, hg: (b, qt, 0))]
    out_shape = [jax.ShapeDtypeStruct((B, S, E), jnp.float32)]
    if return_weights:
        out_specs.append(
            pl.BlockSpec((1, G, q_tile, S), lambda b, qt, hg: (b, hg, qt, 0)))
        out_shape.append(
            jax.ShapeDtypeStruct((B, num_heads, S, S), weights_dtype))

    scratch_shapes = [
        pltpu.VMEM((n_qt, q_tile, E), jnp.bfloat16),   # x (bf16), built once per b
        pltpu.VMEM((HG, S, gw), jnp.bfloat16),         # K, built once per b
        pltpu.VMEM((HG, S, gw), jnp.bfloat16),         # V, built once per b
    ]

    if vmem_limit_bytes is None:
        w_bytes = jnp.dtype(weights_dtype).itemsize
        est = (4 * E * E * 2                       # resident weight slabs (bf16)
               + 2 * S * E * 4                     # double-buffered f32 x block
               + 3 * S * E * 2                     # x(bf16) + K + V scratch
               + 2 * q_tile * E * 4                # double-buffered f32 out block
               + (2 * G * q_tile * S * w_bytes if return_weights else 0)
               + 6 * q_tile * S * 4)               # score/softmax intermediates headroom
        vmem_limit_bytes = int(min(max(32 * 1024 * 1024, 2 * est),
                                   64 * 1024 * 1024))

    grid_spec = pltpu.PrefetchScalarGridSpec(
        num_scalar_prefetch=0,
        grid=(B, n_qt, HG),
        in_specs=in_specs,
        out_specs=tuple(out_specs),
        scratch_shapes=scratch_shapes,
    )

    result = pl.pallas_call(
        kernel,
        grid_spec=grid_spec,
        out_shape=tuple(out_shape),
        compiler_params=pltpu.CompilerParams(
            # Batch is the megacore-parallel axis; qt/hg stay "arbitrary" so the
            # once-per-batch K/V scratch build (guarded by qt==0 & hg==0) is
            # always executed by the core that owns a given batch element.
            dimension_semantics=("parallel", "arbitrary", "arbitrary"),
            vmem_limit_bytes=vmem_limit_bytes),
    )(x, wq_g, wk_g, wv_g, wo_g)

    if return_weights:
        out, attn_w = result
        return out, attn_w
    (out,) = result
    return out


def _reference(x, wq, wk, wv, wo, num_heads):
    """Pure-JAX f32 reference mirroring the PyTorch forward (dropout=0, eval)."""
    B, S, E = x.shape
    hd = E // num_heads
    q = x @ wq.T
    k = x @ wk.T
    v = x @ wv.T

    def split(t):  # (B,S,E) -> (B,H,S,hd)
        return t.reshape(B, S, num_heads, hd).transpose(0, 2, 1, 3)

    q, k, v = split(q), split(k), split(v)
    s = jnp.einsum("bhqd,bhkd->bhqk", q, k) / math.sqrt(hd)
    row = jnp.arange(S)[:, None]
    col = jnp.arange(S)[None, :]
    s = jnp.where((col > row)[None, None], -jnp.inf, s)
    p = jax.nn.softmax(s, axis=-1)
    o = jnp.einsum("bhqk,bhkd->bhqd", p, v)
    o = o.transpose(0, 2, 1, 3).reshape(B, S, E)
    return o @ wo.T, p


if __name__ == "__main__":
    def run_case(B, S, E, H, **kw):
        key = jax.random.PRNGKey(0)
        kx, kq, kk, kv, ko = jax.random.split(key, 5)

        x = jax.random.normal(kx, (B, S, E), dtype=jnp.float32)

        # Deterministic Linear weights (PyTorch layout: (out_features, in_features))
        bound = 1.0 / math.sqrt(E)
        wq = jax.random.uniform(kq, (E, E), jnp.float32, -bound, bound)
        wk = jax.random.uniform(kk, (E, E), jnp.float32, -bound, bound)
        wv = jax.random.uniform(kv, (E, E), jnp.float32, -bound, bound)
        wo = jax.random.uniform(ko, (E, E), jnp.float32, -bound, bound)

        out, attn_w = multi_head_attention(x, wq, wk, wv, wo, num_heads=H, **kw)
        out = jax.block_until_ready(out)
        attn_w = jax.block_until_ready(attn_w)

        ref_out, ref_w = _reference(x, wq, wk, wv, wo, H)
        assert jnp.allclose(out, ref_out, atol=5e-2, rtol=5e-2), \
            ("out mismatch", float(jnp.max(jnp.abs(out - ref_out))))
        assert jnp.allclose(attn_w, ref_w, atol=5e-2, rtol=5e-2), \
            ("attn_w mismatch", float(jnp.max(jnp.abs(attn_w - ref_w))))

    # Small default config (single q tile, all heads in one group).
    run_case(B=2, S=8, E=32, H=4)
    # Exercise query tiling, head grouping and the head-group reduction axis.
    run_case(B=2, S=16, E=64, H=4, q_tile=8, heads_per_step=2)

    print("KERNEL_OK")
</pallas_src>

<mosaic_0001>
module attributes {stable_mosaic.version = 11 : i64} {
  func.func @_mha_kernel(%arg0: i32, %arg1: i32, %arg2: i32, %arg3: memref<1x8x32xf32, #tpu.memory_space<vmem>>, %arg4: memref<1x32x32xbf16, #tpu.memory_space<vmem>>, %arg5: memref<1x32x32xbf16, #tpu.memory_space<vmem>>, %arg6: memref<1x32x32xbf16, #tpu.memory_space<vmem>>, %arg7: memref<1x32x32xbf16, #tpu.memory_space<vmem>>, %arg8: memref<1x8x32xf32, #tpu.memory_space<vmem>>, %arg9: memref<1x4x8x8xf32, #tpu.memory_space<vmem>>, %arg10: memref<1x8x32xbf16, #tpu.memory_space<vmem>>, %arg11: memref<1x8x32xbf16, #tpu.memory_space<vmem>>, %arg12: memref<1x8x32xbf16, #tpu.memory_space<vmem>>) attributes {dimension_semantics = [#tpu.dimension_semantics<parallel>, #tpu.dimension_semantics<arbitrary>, #tpu.dimension_semantics<arbitrary>], iteration_bounds = array<i64: 2, 1, 1>, scalar_prefetch = 0 : i64, scratch_operands = 3 : i64, tpu.core_type = #tpu.core_type<tc>, window_params = [{transform_indices = @transform_0, window_bounds = array<i64: 1, 8, 32>}, {pipeline_mode = #tpu.pipeline_mode<synchronous>, transform_indices = @transform_1, window_bounds = array<i64: 1, 32, 32>}, {pipeline_mode = #tpu.pipeline_mode<synchronous>, transform_indices = @transform_2, window_bounds = array<i64: 1, 32, 32>}, {pipeline_mode = #tpu.pipeline_mode<synchronous>, transform_indices = @transform_3, window_bounds = array<i64: 1, 32, 32>}, {pipeline_mode = #tpu.pipeline_mode<synchronous>, transform_indices = @transform_4, window_bounds = array<i64: 1, 32, 32>}, {transform_indices = @transform_5, window_bounds = array<i64: 1, 8, 32>}, {transform_indices = @transform_6, window_bounds = array<i64: 1, 4, 8, 8>}]} {
    %c0_i32 = arith.constant 0 : i32
    %0 = arith.cmpi eq, %arg1, %c0_i32 : i32
    %c0_i32_0 = arith.constant 0 : i32
    %1 = arith.cmpi eq, %arg2, %c0_i32_0 : i32
    %2 = arith.andi %0, %1 : i1
    %3 = arith.extui %2 : i1 to i32
    %c0_i32_1 = arith.constant 0 : i32
    %4 = arith.cmpi ne, %3, %c0_i32_1 : i32
    scf.if %4 {
      %c0_57 = arith.constant 0 : index
      %c0_58 = arith.constant 0 : index
      %c0_59 = arith.constant 0 : index
      %131 = vector.load %arg3[%c0_57, %c0_58, %c0_59] : memref<1x8x32xf32, #tpu.memory_space<vmem>>, vector<1x8x32xf32>
      %132 = vector.shape_cast %131 : vector<1x8x32xf32> to vector<8x32xf32>
      %133 = arith.truncf %132 : vector<8x32xf32> to vector<8x32xbf16>
      %c0_60 = arith.constant 0 : index
      %c0_61 = arith.constant 0 : index
      %c0_62 = arith.constant 0 : index
      %134 = vector.load %arg10[%c0_60, %c0_61, %c0_62] : memref<1x8x32xbf16, #tpu.memory_space<vmem>>, vector<1x8x32xbf16>
      %135 = vector.shape_cast %134 : vector<1x8x32xbf16> to vector<8x32xbf16>
      %136 = vector.shape_cast %133 : vector<8x32xbf16> to vector<1x8x32xbf16>
      tpu.vector_store %arg10[%c0_60, %c0_61, %c0_62], %136 {strides = array<i32>} : memref<1x8x32xbf16, #tpu.memory_space<vmem>>, vector<1x8x32xbf16>,
      %c0_63 = arith.constant 0 : index
      %c0_64 = arith.constant 0 : index
      %c0_65 = arith.constant 0 : index
      %137 = vector.load %arg5[%c0_63, %c0_64, %c0_65] : memref<1x32x32xbf16, #tpu.memory_space<vmem>>, vector<1x32x32xbf16>
      %138 = vector.shape_cast %137 : vector<1x32x32xbf16> to vector<32x32xbf16>
      %cst_66 = arith.constant dense<0.000000e+00> : vector<8x32xf32>
      %139 = tpu.matmul %133, %138, %cst_66 {dimension_numbers = #tpu.dot_dimension_numbers<[1], [0], [0], [1], [0, 0, 1, 1], [], []>} : vector<8x32xbf16>, vector<32x32xbf16>, vector<8x32xf32> -> vector<8x32xf32>
      %140 = arith.truncf %139 : vector<8x32xf32> to vector<8x32xbf16>
      %c0_67 = arith.constant 0 : index
      %c0_68 = arith.constant 0 : index
      %c0_69 = arith.constant 0 : index
      %141 = vector.load %arg11[%c0_67, %c0_68, %c0_69] : memref<1x8x32xbf16, #tpu.memory_space<vmem>>, vector<1x8x32xbf16>
      %142 = vector.shape_cast %141 : vector<1x8x32xbf16> to vector<8x32xbf16>
      %143 = vector.shape_cast %140 : vector<8x32xbf16> to vector<1x8x32xbf16>
      tpu.vector_store %arg11[%c0_67, %c0_68, %c0_69], %143 {strides = array<i32>} : memref<1x8x32xbf16, #tpu.memory_space<vmem>>, vector<1x8x32xbf16>,
      %c0_70 = arith.constant 0 : index
      %c0_71 = arith.constant 0 : index
      %c0_72 = arith.constant 0 : index
      %144 = vector.load %arg6[%c0_70, %c0_71, %c0_72] : memref<1x32x32xbf16, #tpu.memory_space<vmem>>, vector<1x32x32xbf16>
      %145 = vector.shape_cast %144 : vector<1x32x32xbf16> to vector<32x32xbf16>
      %cst_73 = arith.constant dense<0.000000e+00> : vector<8x32xf32>
      %146 = tpu.matmul %133, %145, %cst_73 {dimension_numbers = #tpu.dot_dimension_numbers<[1], [0], [0], [1], [0, 0, 1, 1], [], []>} : vector<8x32xbf16>, vector<32x32xbf16>, vector<8x32xf32> -> vector<8x32xf32>
      %147 = arith.truncf %146 : vector<8x32xf32> to vector<8x32xbf16>
      %c0_74 = arith.constant 0 : index
      %c0_75 = arith.constant 0 : index
      %c0_76 = arith.constant 0 : index
      %148 = vector.load %arg12[%c0_74, %c0_75, %c0_76] : memref<1x8x32xbf16, #tpu.memory_space<vmem>>, vector<1x8x32xbf16>
      %149 = vector.shape_cast %148 : vector<1x8x32xbf16> to vector<8x32xbf16>
      %150 = vector.shape_cast %147 : vector<8x32xbf16> to vector<1x8x32xbf16>
      tpu.vector_store %arg12[%c0_74, %c0_75, %c0_76], %150 {strides = array<i32>} : memref<1x8x32xbf16, #tpu.memory_space<vmem>>, vector<1x8x32xbf16>,
    } else {
    }
    %5 = arith.index_cast %arg1 : i32 to index
    %c0 = arith.constant 0 : index
    %c0_2 = arith.constant 0 : index
    %6 = vector.load %arg10[%5, %c0, %c0_2] : memref<1x8x32xbf16, #tpu.memory_space<vmem>>, vector<1x8x32xbf16>
    %7 = vector.shape_cast %6 : vector<1x8x32xbf16> to vector<8x32xbf16>
    %8 = arith.index_cast %arg2 : i32 to index
    %c0_3 = arith.constant 0 : index
    %c0_4 = arith.constant 0 : index
    %9 = vector.load %arg4[%8, %c0_3, %c0_4] : memref<1x32x32xbf16, #tpu.memory_space<vmem>>, vector<1x32x32xbf16>
    %10 = vector.shape_cast %9 : vector<1x32x32xbf16> to vector<32x32xbf16>
    %cst = arith.constant dense<0.000000e+00> : vector<8x32xf32>
    %11 = tpu.matmul %7, %10, %cst {dimension_numbers = #tpu.dot_dimension_numbers<[1], [0], [0], [1], [0, 0, 1, 1], [], []>} : vector<8x32xbf16>, vector<32x32xbf16>, vector<8x32xf32> -> vector<8x32xf32>
    %12 = arith.truncf %11 : vector<8x32xf32> to vector<8x32xbf16>
    %13 = arith.index_cast %arg2 : i32 to index
    %c0_5 = arith.constant 0 : index
    %c0_6 = arith.constant 0 : index
    %14 = vector.load %arg11[%13, %c0_5, %c0_6] : memref<1x8x32xbf16, #tpu.memory_space<vmem>>, vector<1x8x32xbf16>
    %15 = vector.shape_cast %14 : vector<1x8x32xbf16> to vector<8x32xbf16>
    %16 = arith.index_cast %arg2 : i32 to index
    %c0_7 = arith.constant 0 : index
    %c0_8 = arith.constant 0 : index
    %17 = vector.load %arg12[%16, %c0_7, %c0_8] : memref<1x8x32xbf16, #tpu.memory_space<vmem>>, vector<1x8x32xbf16>
    %18 = vector.shape_cast %17 : vector<1x8x32xbf16> to vector<8x32xbf16>
    %c8_i32 = arith.constant 8 : i32
    %19 = arith.muli %arg1, %c8_i32 : i32
    %20 = tpu.iota {dimensions = array<i32: 0>} : vector<8x8xi32>
    %21 = vector.broadcast %19 : i32 to vector<8x8xi32>
    %22 = arith.addi %21, %20 : vector<8x8xi32>
    %23 = tpu.iota {dimensions = array<i32: 1>} : vector<8x8xi32>
    %24 = arith.cmpi sgt, %23, %22 : vector<8x8xi32>
    %25 = vector.extract_strided_slice %12 {offsets = [0, 0], sizes = [8, 8], strides = [1, 1]} : vector<8x32xbf16> to vector<8x8xbf16>
    %26 = vector.extract_strided_slice %15 {offsets = [0, 0], sizes = [8, 8], strides = [1, 1]} : vector<8x32xbf16> to vector<8x8xbf16>
    %27 = vector.extract_strided_slice %18 {offsets = [0, 0], sizes = [8, 8], strides = [1, 1]} : vector<8x32xbf16> to vector<8x8xbf16>
    %cst_9 = arith.constant dense<0.000000e+00> : vector<8x8xf32>
    %28 = tpu.matmul %25, %26, %cst_9 {dimension_numbers = #tpu.dot_dimension_numbers<[1], [1], [0], [0], [0, 0, 1, 0], [], []>} : vector<8x8xbf16>, vector<8x8xbf16>, vector<8x8xf32> -> vector<8x8xf32>
    %cst_10 = arith.constant -1.000000e+30 : f32
    %29 = vector.broadcast %cst_10 : f32 to vector<8x8xf32>
    %30 = arith.select %24, %29, %28 : vector<8x8xi1>, vector<8x8xf32>
    %cst_11 = arith.constant dense<0xFF800000> : vector<8xf32>
    %31 = vector.multi_reduction <maximumf>, %30, %cst_11 [1] : vector<8x8xf32> to vector<8xf32>
    %32 = vector.shape_cast %31 : vector<8xf32> to vector<8x1xf32>
    %33 = vector.broadcast %32 : vector<8x1xf32> to vector<8x8xf32>
    %34 = arith.subf %30, %33 : vector<8x8xf32>
    %35 = math.exp %34 : vector<8x8xf32>
    %cst_12 = arith.constant dense<0.000000e+00> : vector<8xf32>
    %36 = vector.multi_reduction <add>, %35, %cst_12 [1] : vector<8x8xf32> to vector<8xf32>
    %37 = vector.shape_cast %36 : vector<8xf32> to vector<8x1xf32>
    %cst_13 = arith.constant 1.000000e+00 : f32
    %38 = vector.broadcast %cst_13 : f32 to vector<8x1xf32>
    %39 = arith.divf %38, %37 : vector<8x1xf32>
    %40 = vector.broadcast %39 : vector<8x1xf32> to vector<8x8xf32>
    %41 = arith.mulf %35, %40 : vector<8x8xf32>
    %c0_14 = arith.constant 0 : index
    %c0_15 = arith.constant 0 : index
    %c0_16 = arith.constant 0 : index
    %c0_17 = arith.constant 0 : index
    %42 = vector.load %arg9[%c0_14, %c0_15, %c0_16, %c0_17] : memref<1x4x8x8xf32, #tpu.memory_space<vmem>>, vector<1x1x8x8xf32>
    %43 = vector.shape_cast %42 : vector<1x1x8x8xf32> to vector<8x8xf32>
    %44 = vector.shape_cast %41 : vector<8x8xf32> to vector<1x1x8x8xf32>
    tpu.vector_store %arg9[%c0_14, %c0_15, %c0_16, %c0_17], %44 {strides = array<i32>} : memref<1x4x8x8xf32, #tpu.memory_space<vmem>>, vector<1x1x8x8xf32>,
    %45 = arith.truncf %41 : vector<8x8xf32> to vector<8x8xbf16>
    %cst_18 = arith.constant dense<0.000000e+00> : vector<8x8xf32>
    %46 = tpu.matmul %45, %27, %cst_18 {dimension_numbers = #tpu.dot_dimension_numbers<[1], [0], [0], [1], [0, 0, 1, 1], [], []>} : vector<8x8xbf16>, vector<8x8xbf16>, vector<8x8xf32> -> vector<8x8xf32>
    %47 = arith.truncf %46 : vector<8x8xf32> to vector<8x8xbf16>
    %48 = vector.extract_strided_slice %12 {offsets = [0, 8], sizes = [8, 8], strides = [1, 1]} : vector<8x32xbf16> to vector<8x8xbf16>
    %49 = vector.extract_strided_slice %15 {offsets = [0, 8], sizes = [8, 8], strides = [1, 1]} : vector<8x32xbf16> to vector<8x8xbf16>
    %50 = vector.extract_strided_slice %18 {offsets = [0, 8], sizes = [8, 8], strides = [1, 1]} : vector<8x32xbf16> to vector<8x8xbf16>
    %cst_19 = arith.constant dense<0.000000e+00> : vector<8x8xf32>
    %51 = tpu.matmul %48, %49, %cst_19 {dimension_numbers = #tpu.dot_dimension_numbers<[1], [1], [0], [0], [0, 0, 1, 0], [], []>} : vector<8x8xbf16>, vector<8x8xbf16>, vector<8x8xf32> -> vector<8x8xf32>
    %cst_20 = arith.constant -1.000000e+30 : f32
    %52 = vector.broadcast %cst_20 : f32 to vector<8x8xf32>
    %53 = arith.select %24, %52, %51 : vector<8x8xi1>, vector<8x8xf32>
    %cst_21 = arith.constant dense<0xFF800000> : vector<8xf32>
    %54 = vector.multi_reduction <maximumf>, %53, %cst_21 [1] : vector<8x8xf32> to vector<8xf32>
    %55 = vector.shape_cast %54 : vector<8xf32> to vector<8x1xf32>
    %56 = vector.broadcast %55 : vector<8x1xf32> to vector<8x8xf32>
    %57 = arith.subf %53, %56 : vector<8x8xf32>
    %58 = math.exp %57 : vector<8x8xf32>
    %cst_22 = arith.constant dense<0.000000e+00> : vector<8xf32>
    %59 = vector.multi_reduction <add>, %58, %cst_22 [1] : vector<8x8xf32> to vector<8xf32>
    %60 = vector.shape_cast %59 : vector<8xf32> to vector<8x1xf32>
    %cst_23 = arith.constant 1.000000e+00 : f32
    %61 = vector.broadcast %cst_23 : f32 to vector<8x1xf32>
    %62 = arith.divf %61, %60 : vector<8x1xf32>
    %63 = vector.broadcast %62 : vector<8x1xf32> to vector<8x8xf32>
    %64 = arith.mulf %58, %63 : vector<8x8xf32>
    %c0_24 = arith.constant 0 : index
    %c1 = arith.constant 1 : index
    %c0_25 = arith.constant 0 : index
    %c0_26 = arith.constant 0 : index
    %65 = vector.load %arg9[%c0_24, %c1, %c0_25, %c0_26] : memref<1x4x8x8xf32, #tpu.memory_space<vmem>>, vector<1x1x8x8xf32>
    %66 = vector.shape_cast %65 : vector<1x1x8x8xf32> to vector<8x8xf32>
    %67 = vector.shape_cast %64 : vector<8x8xf32> to vector<1x1x8x8xf32>
    tpu.vector_store %arg9[%c0_24, %c1, %c0_25, %c0_26], %67 {strides = array<i32>} : memref<1x4x8x8xf32, #tpu.memory_space<vmem>>, vector<1x1x8x8xf32>,
    %68 = arith.truncf %64 : vector<8x8xf32> to vector<8x8xbf16>
    %cst_27 = arith.constant dense<0.000000e+00> : vector<8x8xf32>
    %69 = tpu.matmul %68, %50, %cst_27 {dimension_numbers = #tpu.dot_dimension_numbers<[1], [0], [0], [1], [0, 0, 1, 1], [], []>} : vector<8x8xbf16>, vector<8x8xbf16>, vector<8x8xf32> -> vector<8x8xf32>
    %70 = arith.truncf %69 : vector<8x8xf32> to vector<8x8xbf16>
    %71 = vector.extract_strided_slice %12 {offsets = [0, 16], sizes = [8, 8], strides = [1, 1]} : vector<8x32xbf16> to vector<8x8xbf16>
    %72 = vector.extract_strided_slice %15 {offsets = [0, 16], sizes = [8, 8], strides = [1, 1]} : vector<8x32xbf16> to vector<8x8xbf16>
    %73 = vector.extract_strided_slice %18 {offsets = [0, 16], sizes = [8, 8], strides = [1, 1]} : vector<8x32xbf16> to vector<8x8xbf16>
    %cst_28 = arith.constant dense<0.000000e+00> : vector<8x8xf32>
    %74 = tpu.matmul %71, %72, %cst_28 {dimension_numbers = #tpu.dot_dimension_numbers<[1], [1], [0], [0], [0, 0, 1, 0], [], []>} : vector<8x8xbf16>, vector<8x8xbf16>, vector<8x8xf32> -> vector<8x8xf32>
    %cst_29 = arith.constant -1.000000e+30 : f32
    %75 = vector.broadcast %cst_29 : f32 to vector<8x8xf32>
    %76 = arith.select %24, %75, %74 : vector<8x8xi1>, vector<8x8xf32>
    %cst_30 = arith.constant dense<0xFF800000> : vector<8xf32>
    %77 = vector.multi_reduction <maximumf>, %76, %cst_30 [1] : vector<8x8xf32> to vector<8xf32>
    %78 = vector.shape_cast %77 : vector<8xf32> to vector<8x1xf32>
    %79 = vector.broadcast %78 : vector<8x1xf32> to vector<8x8xf32>
    %80 = arith.subf %76, %79 : vector<8x8xf32>
    %81 = math.exp %80 : vector<8x8xf32>
    %cst_31 = arith.constant dense<0.000000e+00> : vector<8xf32>
    %82 = vector.multi_reduction <add>, %81, %cst_31 [1] : vector<8x8xf32> to vector<8xf32>
    %83 = vector.shape_cast %82 : vector<8xf32> to vector<8x1xf32>
    %cst_32 = arith.constant 1.000000e+00 : f32
    %84 = vector.broadcast %cst_32 : f32 to vector<8x1xf32>
    %85 = arith.divf %84, %83 : vector<8x1xf32>
    %86 = vector.broadcast %85 : vector<8x1xf32> to vector<8x8xf32>
    %87 = arith.mulf %81, %86 : vector<8x8xf32>
    %c0_33 = arith.constant 0 : index
    %c2 = arith.constant 2 : index
    %c0_34 = arith.constant 0 : index
    %c0_35 = arith.constant 0 : index
    %88 = vector.load %arg9[%c0_33, %c2, %c0_34, %c0_35] : memref<1x4x8x8xf32, #tpu.memory_space<vmem>>, vector<1x1x8x8xf32>
    %89 = vector.shape_cast %88 : vector<1x1x8x8xf32> to vector<8x8xf32>
    %90 = vector.shape_cast %87 : vector<8x8xf32> to vector<1x1x8x8xf32>
    tpu.vector_store %arg9[%c0_33, %c2, %c0_34, %c0_35], %90 {strides = array<i32>} : memref<1x4x8x8xf32, #tpu.memory_space<vmem>>, vector<1x1x8x8xf32>,
    %91 = arith.truncf %87 : vector<8x8xf32> to vector<8x8xbf16>
    %cst_36 = arith.constant dense<0.000000e+00> : vector<8x8xf32>
    %92 = tpu.matmul %91, %73, %cst_36 {dimension_numbers = #tpu.dot_dimension_numbers<[1], [0], [0], [1], [0, 0, 1, 1], [], []>} : vector<8x8xbf16>, vector<8x8xbf16>, vector<8x8xf32> -> vector<8x8xf32>
    %93 = arith.truncf %92 : vector<8x8xf32> to vector<8x8xbf16>
    %94 = vector.extract_strided_slice %12 {offsets = [0, 24], sizes = [8, 8], strides = [1, 1]} : vector<8x32xbf16> to vector<8x8xbf16>
    %95 = vector.extract_strided_slice %15 {offsets = [0, 24], sizes = [8, 8], strides = [1, 1]} : vector<8x32xbf16> to vector<8x8xbf16>
    %96 = vector.extract_strided_slice %18 {offsets = [0, 24], sizes = [8, 8], strides = [1, 1]} : vector<8x32xbf16> to vector<8x8xbf16>
    %cst_37 = arith.constant dense<0.000000e+00> : vector<8x8xf32>
    %97 = tpu.matmul %94, %95, %cst_37 {dimension_numbers = #tpu.dot_dimension_numbers<[1], [1], [0], [0], [0, 0, 1, 0], [], []>} : vector<8x8xbf16>, vector<8x8xbf16>, vector<8x8xf32> -> vector<8x8xf32>
    %cst_38 = arith.constant -1.000000e+30 : f32
    %98 = vector.broadcast %cst_38 : f32 to vector<8x8xf32>
    %99 = arith.select %24, %98, %97 : vector<8x8xi1>, vector<8x8xf32>
    %cst_39 = arith.constant dense<0xFF800000> : vector<8xf32>
    %100 = vector.multi_reduction <maximumf>, %99, %cst_39 [1] : vector<8x8xf32> to vector<8xf32>
    %101 = vector.shape_cast %100 : vector<8xf32> to vector<8x1xf32>
    %102 = vector.broadcast %101 : vector<8x1xf32> to vector<8x8xf32>
    %103 = arith.subf %99, %102 : vector<8x8xf32>
    %104 = math.exp %103 : vector<8x8xf32>
    %cst_40 = arith.constant dense<0.000000e+00> : vector<8xf32>
    %105 = vector.multi_reduction <add>, %104, %cst_40 [1] : vector<8x8xf32> to vector<8xf32>
    %106 = vector.shape_cast %105 : vector<8xf32> to vector<8x1xf32>
    %cst_41 = arith.constant 1.000000e+00 : f32
    %107 = vector.broadcast %cst_41 : f32 to vector<8x1xf32>
    %108 = arith.divf %107, %106 : vector<8x1xf32>
    %109 = vector.broadcast %108 : vector<8x1xf32> to vector<8x8xf32>
    %110 = arith.mulf %104, %109 : vector<8x8xf32>
    %c0_42 = arith.constant 0 : index
    %c3 = arith.constant 3 : index
    %c0_43 = arith.constant 0 : index
    %c0_44 = arith.constant 0 : index
    %111 = vector.load %arg9[%c0_42, %c3, %c0_43, %c0_44] : memref<1x4x8x8xf32, #tpu.memory_space<vmem>>, vector<1x1x8x8xf32>
    %112 = vector.shape_cast %111 : vector<1x1x8x8xf32> to vector<8x8xf32>
    %113 = vector.shape_cast %110 : vector<8x8xf32> to vector<1x1x8x8xf32>
    tpu.vector_store %arg9[%c0_42, %c3, %c0_43, %c0_44], %113 {strides = array<i32>} : memref<1x4x8x8xf32, #tpu.memory_space<vmem>>, vector<1x1x8x8xf32>,
    %114 = arith.truncf %110 : vector<8x8xf32> to vector<8x8xbf16>
    %cst_45 = arith.constant dense<0.000000e+00> : vector<8x8xf32>
    %115 = tpu.matmul %114, %96, %cst_45 {dimension_numbers = #tpu.dot_dimension_numbers<[1], [0], [0], [1], [0, 0, 1, 1], [], []>} : vector<8x8xbf16>, vector<8x8xbf16>, vector<8x8xf32> -> vector<8x8xf32>
    %116 = arith.truncf %115 : vector<8x8xf32> to vector<8x8xbf16>
    %117 = tpu.concatenate %47, %70, %93, %116 in 1 : vector<8x8xbf16>, vector<8x8xbf16>, vector<8x8xbf16>, vector<8x8xbf16> -> vector<8x32xbf16>
    %c0_i32_46 = arith.constant 0 : i32
    %118 = arith.cmpi eq, %arg2, %c0_i32_46 : i32
    %119 = arith.extui %118 : i1 to i32
    %c0_i32_47 = arith.constant 0 : i32
    %120 = arith.cmpi ne, %119, %c0_i32_47 : i32
    scf.if %120 {
      %cst_57 = arith.constant 0.000000e+00 : f32
      %131 = vector.broadcast %cst_57 : f32 to vector<1x8x32xf32>
      %c0_58 = arith.constant 0 : index
      %c0_59 = arith.constant 0 : index
      %c0_60 = arith.constant 0 : index
      %132 = vector.load %arg8[%c0_58, %c0_59, %c0_60] : memref<1x8x32xf32, #tpu.memory_space<vmem>>, vector<1x8x32xf32>
      tpu.vector_store %arg8[%c0_58, %c0_59, %c0_60], %131 {strides = array<i32>} : memref<1x8x32xf32, #tpu.memory_space<vmem>>, vector<1x8x32xf32>,
    } else {
    }
    %c0_48 = arith.constant 0 : index
    %c0_49 = arith.constant 0 : index
    %c0_50 = arith.constant 0 : index
    %121 = vector.load %arg8[%c0_48, %c0_49, %c0_50] : memref<1x8x32xf32, #tpu.memory_space<vmem>>, vector<1x8x32xf32>
    %122 = vector.shape_cast %121 : vector<1x8x32xf32> to vector<8x32xf32>
    %123 = arith.index_cast %arg2 : i32 to index
    %c0_51 = arith.constant 0 : index
    %c0_52 = arith.constant 0 : index
    %124 = vector.load %arg7[%123, %c0_51, %c0_52] : memref<1x32x32xbf16, #tpu.memory_space<vmem>>, vector<1x32x32xbf16>
    %125 = vector.shape_cast %124 : vector<1x32x32xbf16> to vector<32x32xbf16>
    %cst_53 = arith.constant dense<0.000000e+00> : vector<8x32xf32>
    %126 = tpu.matmul %117, %125, %cst_53 {dimension_numbers = #tpu.dot_dimension_numbers<[1], [0], [0], [1], [0, 0, 1, 1], [], []>} : vector<8x32xbf16>, vector<32x32xbf16>, vector<8x32xf32> -> vector<8x32xf32>
    %127 = arith.addf %122, %126 : vector<8x32xf32>
    %c0_54 = arith.constant 0 : index
    %c0_55 = arith.constant 0 : index
    %c0_56 = arith.constant 0 : index
    %128 = vector.load %arg8[%c0_54, %c0_55, %c0_56] : memref<1x8x32xf32, #tpu.memory_space<vmem>>, vector<1x8x32xf32>
    %129 = vector.shape_cast %128 : vector<1x8x32xf32> to vector<8x32xf32>
    %130 = vector.shape_cast %127 : vector<8x32xf32> to vector<1x8x32xf32>
    tpu.vector_store %arg8[%c0_54, %c0_55, %c0_56], %130 {strides = array<i32>} : memref<1x8x32xf32, #tpu.memory_space<vmem>>, vector<1x8x32xf32>,
    return
  }
  func.func @transform_0(%arg0: i32, %arg1: i32, %arg2: i32) -> (i32, i32, i32) {
    %c0_i32 = arith.constant 0 : i32
    %c0_i32_0 = arith.constant 0 : i32
    %c0_i32_1 = arith.constant 0 : i32
    return %arg0, %c0_i32, %c0_i32_0 : i32, i32, i32
  }
  func.func @transform_1(%arg0: i32, %arg1: i32, %arg2: i32) -> (i32, i32, i32) {
    %c0_i32 = arith.constant 0 : i32
    %c0_i32_0 = arith.constant 0 : i32
    %c0_i32_1 = arith.constant 0 : i32
    %c0_i32_2 = arith.constant 0 : i32
    return %c0_i32, %c0_i32_0, %c0_i32_1 : i32, i32, i32
  }
  func.func @transform_2(%arg0: i32, %arg1: i32, %arg2: i32) -> (i32, i32, i32) {
    %c0_i32 = arith.constant 0 : i32
    %c0_i32_0 = arith.constant 0 : i32
    %c0_i32_1 = arith.constant 0 : i32
    %c0_i32_2 = arith.constant 0 : i32
    return %c0_i32, %c0_i32_0, %c0_i32_1 : i32, i32, i32
  }
  func.func @transform_3(%arg0: i32, %arg1: i32, %arg2: i32) -> (i32, i32, i32) {
    %c0_i32 = arith.constant 0 : i32
    %c0_i32_0 = arith.constant 0 : i32
    %c0_i32_1 = arith.constant 0 : i32
    %c0_i32_2 = arith.constant 0 : i32
    return %c0_i32, %c0_i32_0, %c0_i32_1 : i32, i32, i32
  }
  func.func @transform_4(%arg0: i32, %arg1: i32, %arg2: i32) -> (i32, i32, i32) {
    %c0_i32 = arith.constant 0 : i32
    %c0_i32_0 = arith.constant 0 : i32
    %c0_i32_1 = arith.constant 0 : i32
    %c0_i32_2 = arith.constant 0 : i32
    return %c0_i32, %c0_i32_0, %c0_i32_1 : i32, i32, i32
  }
  func.func @transform_5(%arg0: i32, %arg1: i32, %arg2: i32) -> (i32, i32, i32) {
    %c0_i32 = arith.constant 0 : i32
    %c0_i32_0 = arith.constant 0 : i32
    return %arg0, %arg1, %c0_i32 : i32, i32, i32
  }
  func.func @transform_6(%arg0: i32, %arg1: i32, %arg2: i32) -> (i32, i32, i32, i32) {
    %c0_i32 = arith.constant 0 : i32
    %c0_i32_0 = arith.constant 0 : i32
    return %arg0, %arg2, %arg1, %c0_i32 : i32, i32, i32, i32
  }
}

</mosaic_0001>

<llo_original>
// kernel: tpu_custom_call.1
$region0: #{tpu_custom_call.1}
  #allocation0 [shape = 'u32[]', space=smem, size = 0x4, offset = 0x4, fixed_abs, tag = 'smem constant byte address 0x4 - core index']
  #allocation1 [shape = 'u32[144,128]{1,0:T(1,128)}', space=vmem, size = 0x12000, scoped, tag = 'internal scratch']
  #allocation2 [shape = 'bf16[1,8,32]{2,1,0:T(8,128)(2,1)}', space=vmem, size = 0x800, scoped, tag = 'scratch operand']
  #allocation3 [shape = 'bf16[1,8,32]{2,1,0:T(8,128)(2,1)}', space=vmem, size = 0x800, scoped, tag = 'scratch operand']
  #allocation4 [shape = 'bf16[1,8,32]{2,1,0:T(8,128)(2,1)}', space=vmem, size = 0x800, scoped, tag = 'scratch operand']
  %s0 = inlined_call_operand.hbm [shape: f32[2,8,32], index: 0, kind: input, shape index: {}]
  %s1 = inlined_call_operand.hbm [shape: bf16[1,32,32], index: 1, kind: input, shape index: {}]
  %s2 = inlined_call_operand.hbm [shape: bf16[1,32,32], index: 2, kind: input, shape index: {}]
  %s3 = inlined_call_operand.hbm [shape: bf16[1,32,32], index: 3, kind: input, shape index: {}]
  %s4 = inlined_call_operand.hbm [shape: bf16[1,32,32], index: 4, kind: input, shape index: {}]
  %s5 = inlined_call_operand.hbm [shape: f32[2,8,32], index: 5, kind: output, shape index: {0}]
  %s6 = inlined_call_operand.hbm [shape: f32[2,4,8,8], index: 6, kind: output, shape index: {1}]
  %7 = xla_tuple %s5, %s6
  %s8 = sld [smem:[#allocation0]]
  $region89: #{tpu_custom_call.1} parent=0
    _
  %s10 = ssub.s32 1, %s8
  %s11 = scalar_select 0, %s10, %s8
  $region1: #{tpu_custom_call.1} parent=0
    #allocation5 [shape = 'u8[8192]{0}', space=vmem, size = 0x2000, scoped, tag = 'input window, operand 0']
    #allocation6 [shape = 's32[2]{0}', space=sflag, size = 0x8, scoped, tag = 'scoped memory for tpu_custom_call.1']
    #allocation7 [shape = 's32[2]{0}', space=sflag, size = 0x8, scoped, tag = 'scoped memory for tpu_custom_call.1']
    #allocation8 [shape = 'u8[8192]{0}', space=vmem, size = 0x2000, scoped, tag = 'input window, operand 1, single buffered']
    #allocation9 [shape = 's32[1]{0}', space=sflag, size = 0x4, scoped, tag = 'scoped memory for tpu_custom_call.1']
    #allocation10 [shape = 'u8[8192]{0}', space=vmem, size = 0x2000, scoped, tag = 'input window, operand 2, single buffered']
    #allocation11 [shape = 'u8[8192]{0}', space=vmem, size = 0x2000, scoped, tag = 'input window, operand 3, single buffered']
    #allocation12 [shape = 's32[1]{0}', space=sflag, size = 0x4, scoped, tag = 'scoped memory for tpu_custom_call.1']
    #allocation13 [shape = 'u8[8192]{0}', space=vmem, size = 0x2000, scoped, tag = 'input window, operand 4, single buffered']
    #allocation14 [shape = 'u8[8192]{0}', space=vmem, size = 0x2000, scoped, tag = 'output window, operand 0']
    #allocation15 [shape = 'u8[32768]{0}', space=vmem, size = 0x8000, scoped, tag = 'output window, operand 1']
    #allocation16 [shape = 's32[2]{0}', space=sflag, size = 0x8, scoped, tag = 'scoped memory for tpu_custom_call.1']
    %12 = vsyncpa [#allocation6], 0
    %s13 = scalar_lea.sflag [#allocation6], 1
    %14 = vsyncpa %s13, 0
    %15 = vsyncpa [#allocation9], 0
    %16 = vsyncpa [#allocation12], 0
    %17 = vsyncpa [#allocation7], 0
    %s18 = scalar_lea.sflag [#allocation7], 1
    %19 = vsyncpa %s18, 0
    %20 = vsyncpa [#allocation16], 0
    %s21 = scalar_lea.sflag [#allocation16], 1
    %22 = vsyncpa %s21, 0
    loop: start=0, step=1, limit=4
    $region2: #{tpu_custom_call.1} parent=1 // loop_pre_header
      _
    $region3: #{tpu_custom_call.1} parent=1 // loop_header
      %s24 = sphi 0, %s28
      %p25 = scmp.ge.s32.totalorder %s24, 4
      %s31 = sphi 0, %s50
      %s32 = sphi 0, %s46
      %s33 = sphi 0, %s42
      %s34 = sphi 0, %s31
      %s35 = sphi 0, %s32
      %s36 = sphi 0, %s33
      %s37 = sphi 0, %s34
      %s38 = sphi 0, %s35
      %s39 = sphi 0, %s36
      %s53 = sphi 0, %s55
      %s56 = sphi 0, %s53
      %s57 = sphi 0, %s56
      %s73 = sphi 0, %s57
      %s77 = sphi 0, %s77
      %s79 = sphi 0, %s77
      %s80 = sphi 0, %s79
      %s94 = sphi 0, %s80
      %s98 = sphi 0, %s98
      %s100 = sphi 0, %s98
      %s101 = sphi 0, %s100
      %s115 = sphi 0, %s101
      %s119 = sphi 0, %s119
      %s121 = sphi 0, %s119
      %s122 = sphi 0, %s121
      %s136 = sphi 0, %s122
      %s140 = sphi 0, %s140
      %s142 = sphi 0, %s140
      %s143 = sphi 0, %s142
      %s157 = sphi 0, %s143
      %s165 = sphi 0, %s167
      %s168 = sphi 0, %s165
      %s169 = sphi 0, %s168
      %s185 = sphi 0, %s169
      %s195 = sphi 0, %s197
      %s198 = sphi 0, %s195
      %s199 = sphi 0, %s198
      %s215 = sphi 0, %s199
    $region4: #{tpu_custom_call.1} parent=1 // loop_header_branch
      %27 = sbr.rel (%p25) target = $region8
    $region5: #{tpu_custom_call.1} parent=1 // loop_body
      %s29 = ssub.s32 %s24, 1
      %s30 = ssub.s32 %s24, 2
      %s40 = sadd.s32 1, %s33
      %p41 = scmp.ge.s32.totalorder %s40, 1
      %s42 = scalar_select %p41, 0, %s40
      %s43 = sadd.s32 1, %s32
      %s44 = scalar_select %p41, %s43, %s32
      %p45 = scmp.ge.s32.totalorder %s44, 1
      %s46 = scalar_select %p45, 0, %s44
      %s47 = sadd.s32 1, %s31
      %s48 = scalar_select %p45, %s47, %s31
      %p49 = scmp.ge.s32.totalorder %s48, 2
      %s50 = scalar_select %p49, 0, %s48
      %s51 = ssub.s32 %s31, %s50
      %p52 = scmp.eq.s32.totalorder %s51, 0
      %s54 = sadd.s32 %s53, 1
      %s55 = scalar_select %p52, %s53, %s54
      %p58 = pneg %p52
      %p59 = scmp.eq.s32.totalorder %s24, 1
      %p60 = por %p58, %p59
      %p61 = scmp.ne.s32.totalorder %s53, %s56
      %p62 = scmp.eq.s32.totalorder %s24, 0
      %p63 = por %p61, %p62
      %p64 = scmp.ne.s32.totalorder %s53, %s56
      %p65 = scmp.eq.s32.totalorder %s29, 1
      %p66 = por %p64, %p65
      %p67 = scmp.ne.s32.totalorder %s56, %s57
      %p68 = scmp.eq.s32.totalorder %s29, 0
      %p69 = por %p67, %p68
      %p70 = scmp.ne.s32.totalorder %s56, %s57
      %p71 = scmp.eq.s32.totalorder %s30, 1
      %p72 = por %p70, %p71
      %p74 = scmp.ne.s32.totalorder %s57, %s73
      %p75 = scmp.eq.s32.totalorder %s30, 0
      %p76 = por %p74, %p75
      %s78 = sadd.s32 %s77, 1
      %p81 = scmp.eq.s32.totalorder %s24, 1
      %p82 = scmp.ne.s32.totalorder %s77, %s79
      %p83 = scmp.eq.s32.totalorder %s24, 0
      %p84 = por %p82, %p83
      %p85 = scmp.ne.s32.totalorder %s77, %s79
      %p86 = scmp.eq.s32.totalorder %s29, 1
      %p87 = por %p85, %p86
      %p88 = scmp.ne.s32.totalorder %s79, %s80
      %p89 = scmp.eq.s32.totalorder %s29, 0
      %p90 = por %p88, %p89
      %p91 = scmp.ne.s32.totalorder %s79, %s80
      %p92 = scmp.eq.s32.totalorder %s30, 1
      %p93 = por %p91, %p92
      %p95 = scmp.ne.s32.totalorder %s80, %s94
      %p96 = scmp.eq.s32.totalorder %s30, 0
      %p97 = por %p95, %p96
      %s99 = sadd.s32 %s98, 1
      %p102 = scmp.eq.s32.totalorder %s24, 1
      %p103 = scmp.ne.s32.totalorder %s98, %s100
      %p104 = scmp.eq.s32.totalorder %s24, 0
      %p105 = por %p103, %p104
      %p106 = scmp.ne.s32.totalorder %s98, %s100
      %p107 = scmp.eq.s32.totalorder %s29, 1
      %p108 = por %p106, %p107
      %p109 = scmp.ne.s32.totalorder %s100, %s101
      %p110 = scmp.eq.s32.totalorder %s29, 0
      %p111 = por %p109, %p110
      %p112 = scmp.ne.s32.totalorder %s100, %s101
      %p113 = scmp.eq.s32.totalorder %s30, 1
      %p114 = por %p112, %p113
      %p116 = scmp.ne.s32.totalorder %s101, %s115
      %p117 = scmp.eq.s32.totalorder %s30, 0
      %p118 = por %p116, %p117
      %s120 = sadd.s32 %s119, 1
      %p123 = scmp.eq.s32.totalorder %s24, 1
      %p124 = scmp.ne.s32.totalorder %s119, %s121
      %p125 = scmp.eq.s32.totalorder %s24, 0
      %p126 = por %p124, %p125
      %p127 = scmp.ne.s32.totalorder %s119, %s121
      %p128 = scmp.eq.s32.totalorder %s29, 1
      %p129 = por %p127, %p128
      %p130 = scmp.ne.s32.totalorder %s121, %s122
      %p131 = scmp.eq.s32.totalorder %s29, 0
      %p132 = por %p130, %p131
      %p133 = scmp.ne.s32.totalorder %s121, %s122
      %p134 = scmp.eq.s32.totalorder %s30, 1
      %p135 = por %p133, %p134
      %p137 = scmp.ne.s32.totalorder %s122, %s136
      %p138 = scmp.eq.s32.totalorder %s30, 0
      %p139 = por %p137, %p138
      %s141 = sadd.s32 %s140, 1
      %p144 = scmp.eq.s32.totalorder %s24, 1
      %p145 = scmp.ne.s32.totalorder %s140, %s142
      %p146 = scmp.eq.s32.totalorder %s24, 0
      %p147 = por %p145, %p146
      %p148 = scmp.ne.s32.totalorder %s140, %s142
      %p149 = scmp.eq.s32.totalorder %s29, 1
      %p150 = por %p148, %p149
      %p151 = scmp.ne.s32.totalorder %s142, %s143
      %p152 = scmp.eq.s32.totalorder %s29, 0
      %p153 = por %p151, %p152
      %p154 = scmp.ne.s32.totalorder %s142, %s143
      %p155 = scmp.eq.s32.totalorder %s30, 1
      %p156 = por %p154, %p155
      %p158 = scmp.ne.s32.totalorder %s143, %s157
      %p159 = scmp.eq.s32.totalorder %s30, 0
      %p160 = por %p158, %p159
      %s161 = ssub.s32 %s31, %s50
      %s162 = ssub.s32 %s32, %s46
      %s163 = sor.u32 %s161, %s162
      %p164 = scmp.eq.s32.totalorder %s163, 0
      %s166 = sadd.s32 %s165, 1
      %s167 = scalar_select %p164, %s165, %s166
      %p170 = pneg %p164
      %p171 = scmp.eq.s32.totalorder %s24, 1
      %p172 = por %p170, %p171
      %p173 = scmp.ne.s32.totalorder %s165, %s168
      %p174 = scmp.eq.s32.totalorder %s24, 0
      %p175 = por %p173, %p174
      %p176 = scmp.ne.s32.totalorder %s165, %s168
      %p177 = scmp.eq.s32.totalorder %s29, 1
      %p178 = por %p176, %p177
      %p179 = scmp.ne.s32.totalorder %s168, %s169
      %p180 = scmp.eq.s32.totalorder %s29, 0
      %p181 = por %p179, %p180
      %p182 = scmp.ne.s32.totalorder %s168, %s169
      %p183 = scmp.eq.s32.totalorder %s30, 1
      %p184 = por %p182, %p183
      %p186 = scmp.ne.s32.totalorder %s169, %s185
      %p187 = scmp.eq.s32.totalorder %s30, 0
      %p188 = por %p186, %p187
      %s189 = ssub.s32 %s31, %s50
      %s190 = ssub.s32 %s33, %s42
      %s191 = sor.u32 %s189, %s190
      %s192 = ssub.s32 %s32, %s46
      %s193 = sor.u32 %s191, %s192
      %p194 = scmp.eq.s32.totalorder %s193, 0
      %s196 = sadd.s32 %s195, 1
      %s197 = scalar_select %p194, %s195, %s196
      %p200 = pneg %p194
      %p201 = scmp.eq.s32.totalorder %s24, 1
      %p202 = por %p200, %p201
      %p203 = scmp.ne.s32.totalorder %s195, %s198
      %p204 = scmp.eq.s32.totalorder %s24, 0
      %p205 = por %p203, %p204
      %p206 = scmp.ne.s32.totalorder %s195, %s198
      %p207 = scmp.eq.s32.totalorder %s29, 1
      %p208 = por %p206, %p207
      %p209 = scmp.ne.s32.totalorder %s198, %s199
      %p210 = scmp.eq.s32.totalorder %s29, 0
      %p211 = por %p209, %p210
      %p212 = scmp.ne.s32.totalorder %s198, %s199
      %p213 = scmp.eq.s32.totalorder %s30, 1
      %p214 = por %p212, %p213
      %p216 = scmp.ne.s32.totalorder %s199, %s215
      %p217 = scmp.eq.s32.totalorder %s30, 0
      %p218 = por %p216, %p217
      %p219 = scmp.le.s32.totalorder 1, %s24
      %p220 = scmp.lt.s32.totalorder %s24, 3
      %p221 = pnand %p219, %p220
      %p222 = pneg %p221
      // Predicated region
      $region9: #{tpu_custom_call.1} parent=5 // pred_check
        _
      $region10: #{tpu_custom_call.1} parent=5 // pred_check_branch
        %224 = sbr.rel (%p221) target = $region12
      $region11: #{tpu_custom_call.1} parent=5 // pred_region
        %s225 = ssub.s32 %s24, 1
        // Predicated region
        $region13: #{tpu_custom_call.1} parent=11 // pred_check
          %p226 = pneg %p90
        $region14: #{tpu_custom_call.1} parent=11 // pred_check_branch
          %228 = sbr.rel (%p226) target = $region16
        $region15: #{tpu_custom_call.1} parent=11 // pred_region
          %s230 = ssub.s32 256, 256
          %231 = vsyncadd [#allocation9], %s230
          %s232 = sshll.u32 [#allocation8], 4
          %s233 = int_to_ptr.vmem [resolvable:$true] %s232
          %238 = dma.hbm_to_vmem [thread:$0]  %s1, 256, %s233, [#allocation9], 64, 64, 4
        $region16: #{tpu_custom_call.1} parent=11 // pred_fallthru
          _
        // Predicated region
        $region17: #{tpu_custom_call.1} parent=11 // pred_check
          %p239 = pneg %p111
        $region18: #{tpu_custom_call.1} parent=11 // pred_check_branch
          %241 = sbr.rel (%p239) target = $region20
        $region19: #{tpu_custom_call.1} parent=11 // pred_region
          %s243 = ssub.s32 256, 256
          %244 = vsyncadd [#allocation9], %s243
          %s245 = sshll.u32 [#allocation10], 4
          %s246 = int_to_ptr.vmem [resolvable:$true] %s245
          %251 = dma.hbm_to_vmem [thread:$0]  %s2, 256, %s246, [#allocation9], 64, 64, 4
        $region20: #{tpu_custom_call.1} parent=11 // pred_fallthru
          _
        // Predicated region
        $region21: #{tpu_custom_call.1} parent=11 // pred_check
          %p252 = pneg %p132
        $region22: #{tpu_custom_call.1} parent=11 // pred_check_branch
          %254 = sbr.rel (%p252) target = $region24
        $region23: #{tpu_custom_call.1} parent=11 // pred_region
          %s256 = ssub.s32 256, 256
          %257 = vsyncadd [#allocation12], %s256
          %s258 = sshll.u32 [#allocation11], 4
          %s259 = int_to_ptr.vmem [resolvable:$true] %s258
          %264 = dma.hbm_to_vmem [thread:$0]  %s3, 256, %s259, [#allocation12], 64, 64, 4
        $region24: #{tpu_custom_call.1} parent=11 // pred_fallthru
          _
        // Predicated region
        $region25: #{tpu_custom_call.1} parent=11 // pred_check
          %p265 = pneg %p153
        $region26: #{tpu_custom_call.1} parent=11 // pred_check_branch
          %267 = sbr.rel (%p265) target = $region28
        $region27: #{tpu_custom_call.1} parent=11 // pred_region
          %s269 = ssub.s32 256, 256
          %270 = vsyncadd [#allocation12], %s269
          %s271 = sshll.u32 [#allocation13], 4
          %s272 = int_to_ptr.vmem [resolvable:$true] %s271
          %277 = dma.hbm_to_vmem [thread:$0]  %s4, 256, %s272, [#allocation12], 64, 64, 4
        $region28: #{tpu_custom_call.1} parent=11 // pred_fallthru
          _
      $region12: #{tpu_custom_call.1} parent=5 // pred_fallthru
        _
      %p278 = scmp.lt.s32.totalorder %s24, 2
      // Predicated region
      $region29: #{tpu_custom_call.1} parent=5 // pred_check
        %p279 = pneg %p278
      $region30: #{tpu_custom_call.1} parent=5 // pred_check_branch
        %281 = sbr.rel (%p279) target = $region32
      $region31: #{tpu_custom_call.1} parent=5 // pred_region
        // Predicated region
        $region33: #{tpu_custom_call.1} parent=31 // pred_check
          %p282 = pneg %p63
        $region34: #{tpu_custom_call.1} parent=31 // pred_check_branch
          %284 = sbr.rel (%p282) target = $region36
        $region35: #{tpu_custom_call.1} parent=31 // pred_region
          %s285 = sand.u32 %s53, 1
          %s286 = scalar_lea.sflag [#allocation6], %s285
          %s287 = sand.u32 %s53, 1
          %s288 = smul.addr %s287, 8
          %s289 = scalar_lea.vmem [#allocation5], %s288
          %s291 = ssub.s32 128, 128
          %292 = vsyncadd %s286, %s291
          %s293 = smul.addr %s31, 128
          %s294 = scalar_lea.hbm %s0, %s293
          %s296 = sshll.u32 %s289, 4
          %s297 = int_to_ptr.vmem [resolvable:$true] %s296
          %299 = dma.hbm_to_vmem [thread:$0]  %s294, 128, %s297, %s286
        $region36: #{tpu_custom_call.1} parent=31 // pred_fallthru
          _
      $region32: #{tpu_custom_call.1} parent=5 // pred_fallthru
        _
      %p300 = scmp.le.s32.totalorder 1, %s24
      %p301 = scmp.lt.s32.totalorder %s24, 3
      %p302 = pnand %p300, %p301
      %p303 = pneg %p302
      // Predicated region
      $region37: #{tpu_custom_call.1} parent=5 // pred_check
        _
      $region38: #{tpu_custom_call.1} parent=5 // pred_check_branch
        %305 = sbr.rel (%p302) target = $region40
      $region39: #{tpu_custom_call.1} parent=5 // pred_region
        %s306 = ssub.s32 %s24, 1
        %s307 = sand.u32 %s56, 1
        %s308 = scalar_lea.sflag [#allocation6], %s307
        %s309 = sand.u32 %s56, 1
        %s310 = smul.addr %s309, 8
        %s311 = scalar_lea.vmem [#allocation5], %s310
        // Predicated region
        $region41: #{tpu_custom_call.1} parent=39 // pred_check
          %p312 = pneg %p69
        $region42: #{tpu_custom_call.1} parent=39 // pred_check_branch
          %314 = sbr.rel (%p312) target = $region44
        $region43: #{tpu_custom_call.1} parent=39 // pred_region
          %315 = dma.done %s308, 128
        $region44: #{tpu_custom_call.1} parent=39 // pred_fallthru
          _
        // Predicated region
        $region45: #{tpu_custom_call.1} parent=39 // pred_check
          %p316 = pneg %p90
        $region46: #{tpu_custom_call.1} parent=39 // pred_check_branch
          %318 = sbr.rel (%p316) target = $region48
        $region47: #{tpu_custom_call.1} parent=39 // pred_region
          %319 = dma.done [#allocation9], 256
        $region48: #{tpu_custom_call.1} parent=39 // pred_fallthru
          _
        // Predicated region
        $region49: #{tpu_custom_call.1} parent=39 // pred_check
          %p320 = pneg %p111
        $region50: #{tpu_custom_call.1} parent=39 // pred_check_branch
          %322 = sbr.rel (%p320) target = $region52
        $region51: #{tpu_custom_call.1} parent=39 // pred_region
          %323 = dma.done [#allocation9], 256
        $region52: #{tpu_custom_call.1} parent=39 // pred_fallthru
          _
        // Predicated region
        $region53: #{tpu_custom_call.1} parent=39 // pred_check
          %p324 = pneg %p132
        $region54: #{tpu_custom_call.1} parent=39 // pred_check_branch
          %326 = sbr.rel (%p324) target = $region56
        $region55: #{tpu_custom_call.1} parent=39 // pred_region
          %327 = dma.done [#allocation12], 256
        $region56: #{tpu_custom_call.1} parent=39 // pred_fallthru
          _
        // Predicated region
        $region57: #{tpu_custom_call.1} parent=39 // pred_check
          %p328 = pneg %p153
        $region58: #{tpu_custom_call.1} parent=39 // pred_check_branch
          %330 = sbr.rel (%p328) target = $region60
        $region59: #{tpu_custom_call.1} parent=39 // pred_region
          %331 = dma.done [#allocation12], 256
        $region60: #{tpu_custom_call.1} parent=39 // pred_fallthru
          _
        %s332 = sand.u32 %s56, 1
        %s333 = scalar_lea.sflag [#allocation6], %s332
        %s334 = sand.u32 %s56, 1
        %s335 = smul.addr %s334, 8
        %s336 = scalar_lea.vmem [#allocation5], %s335
        %p337 = pneg %p69
        %p338 = pneg %p66
        %p339 = pneg %p90
        %p340 = pneg %p87
        %p341 = pneg %p111
        %p342 = pneg %p108
        %p343 = pneg %p132
        %p344 = pneg %p129
        %p345 = pneg %p153
        %p346 = pneg %p150
        %p347 = pneg %p181
        %p348 = pneg %p178
        %s349 = sand.u32 %s168, 1
        %s350 = scalar_lea.sflag [#allocation7], %s349
        %s351 = sand.u32 %s168, 1
        %s352 = smul.addr %s351, 8
        %s353 = scalar_lea.vmem [#allocation14], %s352
        %p354 = pneg %p211
        %p355 = pneg %p208
        %s356 = sand.u32 %s198, 1
        %s357 = scalar_lea.sflag [#allocation16], %s356
        %s358 = sand.u32 %s198, 1
        %s359 = smul.addr %s358, 32
        %s360 = scalar_lea.vmem [#allocation15], %s359
        %s361 = smul.u32 4, %s36
        %p363 = scmp.eq.s32.totalorder %s35, 0
        %p364 = scmp.eq.s32.totalorder %s36, 0
        %p365 = pnand %p363, %p364
        %p366 = pneg %p365
        // Predicated region
        $region61: #{tpu_custom_call.1} parent=39 // pred_check
          _
        $region62: #{tpu_custom_call.1} parent=39 // pred_check_branch
          %368 = sbr.rel (%p365) target = $region64
        $region63: #{tpu_custom_call.1} parent=39 // pred_region
          %v369 = vld [vmem:[%s311] sm:$0xff]
          %v370 = vpack.c.bf16 %v369, %v369
          %vm371 = vcmask 257024
          %372 = vst.msk [vmem:[#allocation2] sm:$0xf] %vm371, %v370
          %v373 = vld [vmem:[#allocation10] sm:$0xf]
          %v374 = vld [vmem:[#allocation10 + $0x4] sm:$0xf]
          %v375 = vld [vmem:[#allocation10 + $0x8] sm:$0xf]
          %v376 = vld [vmem:[#allocation10 + $0xc] sm:$0xf]
          %v381 = vunpack.c.l.b16 %v373
          %v382 = vunpack.c.l.b16 %v374
          %v383 = vunpack.c.l.b16 %v375
          %v384 = vunpack.c.l.b16 %v376
          %v385 = vpack.c.b16 %v382, %v381
          %v386 = vpack.c.b16 %v384, %v383
          %vm389 = vcmask 261120
          %v391 = vsel %vm389, %v370, 0
          %393 = vmatprep.subr.bf16.mxu0 0
          %394 = vmatpush1.bf16.msra.mxu0 %v385
          %395 = vmatprep.subr.bf16.mxu0 0
          %396 = vmatpush1.bf16.msra.mxu0 %v386
          %397 = vmatprep.subr.bf16.mxu0 0
          %398 = vmatpush1.bf16.msra.mxu0 0
          %399 = vmatprep.subr.bf16.mxu0 0
          %400 = vmatpush1.bf16.msra.mxu0 0
          %401 = vmatprep.subr.bf16.mxu0 0
          %402 = vmatpush1.bf16.msra.mxu0 0
          %403 = vmatprep.subr.bf16.mxu0 0
          %404 = vmatpush1.bf16.msra.mxu0 0
          %405 = vmatprep.subr.bf16.mxu0 0
          %406 = vmatpush1.bf16.msra.mxu0 0
          %407 = vmatprep.subr.bf16.mxu0 0
          %408 = vmatpush1.bf16.msra.mxu0 0
          %409 = vmatprep.subr.bf16.mxu0 0
          %410 = vmatpush1.bf16.msra.mxu0 0
          %411 = vmatprep.subr.bf16.mxu0 0
          %412 = vmatpush1.bf16.msra.mxu0 0
          %413 = vmatprep.subr.bf16.mxu0 0
          %414 = vmatpush1.bf16.msra.mxu0 0
          %415 = vmatprep.subr.bf16.mxu0 0
          %416 = vmatpush1.bf16.msra.mxu0 0
          %417 = vmatprep.subr.bf16.mxu0 0
          %418 = vmatpush1.bf16.msra.mxu0 0
          %419 = vmatprep.subr.bf16.mxu0 0
          %420 = vmatpush1.bf16.msra.mxu0 0
          %421 = vmatprep.subr.bf16.mxu0 0
          %422 = vmatpush1.bf16.msra.mxu0 0
          %423 = vmatprep.subr.bf16.mxu0 0
          %424 = vmatpush1.bf16.msra.mxu0 0
          %425 = vmatprep.mubr.bf16.mxu0 0
          %426 = vmatmul.mubr.bf16.gmra.mrb[0].mxu0 %v391
          %v427 = vpop.f32.mrb[0].mxu0
          %v428 = vadd.f32 0.0, %v427
          %v429 = vpop.f32.mrb[0].mxu0
          %v430 = vpop.f32.mrb[0].mxu0
          %v431 = vpop.f32.mrb[0].mxu0
          %432 = vdwg.mxu0
          %v433 = vpack.c.bf16 %v428, %v428
          %434 = vst.msk [vmem:[#allocation3] sm:$0xf] %vm371, %v433
          %v435 = vld [vmem:[#allocation11] sm:$0xf]
          %v436 = vld [vmem:[#allocation11 + $0x4] sm:$0xf]
          %v437 = vld [vmem:[#allocation11 + $0x8] sm:$0xf]
          %v438 = vld [vmem:[#allocation11 + $0xc] sm:$0xf]
          %v443 = vunpack.c.l.b16 %v435
          %v444 = vunpack.c.l.b16 %v436
          %v445 = vunpack.c.l.b16 %v437
          %v446 = vunpack.c.l.b16 %v438
          %v447 = vpack.c.b16 %v444, %v443
          %v448 = vpack.c.b16 %v446, %v445
          %451 = vmatprep.subr.bf16.mxu0 0
          %452 = vmatpush1.bf16.msra.mxu0 %v447
          %453 = vmatprep.subr.bf16.mxu0 0
          %454 = vmatpush1.bf16.msra.mxu0 %v448
          %455 = vmatprep.subr.bf16.mxu0 0
          %456 = vmatpush1.bf16.msra.mxu0 0
          %457 = vmatprep.subr.bf16.mxu0 0
          %458 = vmatpush1.bf16.msra.mxu0 0
          %459 = vmatprep.subr.bf16.mxu0 0
          %460 = vmatpush1.bf16.msra.mxu0 0
          %461 = vmatprep.subr.bf16.mxu0 0
          %462 = vmatpush1.bf16.msra.mxu0 0
          %463 = vmatprep.subr.bf16.mxu0 0
          %464 = vmatpush1.bf16.msra.mxu0 0
          %465 = vmatprep.subr.bf16.mxu0 0
          %466 = vmatpush1.bf16.msra.mxu0 0
          %467 = vmatprep.subr.bf16.mxu0 0
          %468 = vmatpush1.bf16.msra.mxu0 0
          %469 = vmatprep.subr.bf16.mxu0 0
          %470 = vmatpush1.bf16.msra.mxu0 0
          %471 = vmatprep.subr.bf16.mxu0 0
          %472 = vmatpush1.bf16.msra.mxu0 0
          %473 = vmatprep.subr.bf16.mxu0 0
          %474 = vmatpush1.bf16.msra.mxu0 0
          %475 = vmatprep.subr.bf16.mxu0 0
          %476 = vmatpush1.bf16.msra.mxu0 0
          %477 = vmatprep.subr.bf16.mxu0 0
          %478 = vmatpush1.bf16.msra.mxu0 0
          %479 = vmatprep.subr.bf16.mxu0 0
          %480 = vmatpush1.bf16.msra.mxu0 0
          %481 = vmatprep.subr.bf16.mxu0 0
          %482 = vmatpush1.bf16.msra.mxu0 0
          %483 = vmatprep.mubr.bf16.mxu0 0
          %484 = vmatmul.mubr.bf16.gmra.mrb[0].mxu0 %v391
          %v485 = vpop.f32.mrb[0].mxu0
          %v486 = vadd.f32 0.0, %v485
          %v487 = vpop.f32.mrb[0].mxu0
          %v488 = vpop.f32.mrb[0].mxu0
          %v489 = vpop.f32.mrb[0].mxu0
          %490 = vdwg.mxu0
          %v491 = vpack.c.bf16 %v486, %v486
          %492 = vst.msk [vmem:[#allocation4] sm:$0xf] %vm371, %v491
        $region64: #{tpu_custom_call.1} parent=39 // pred_fallthru
          _
        %s493 = smul.addr %s35, 4
        %s494 = scalar_lea.vmem [#allocation2], %s493
        %v495 = vld [vmem:[%s494] sm:$0xf]
        %s496 = smul.u32 %s36, 4
        %s497 = smul.addr %s496, 4
        %s498 = scalar_lea.vmem [#allocation8], %s497
        %v499 = vld [vmem:[%s498] sm:$0xf]
        %v500 = vld [vmem:[%s498 + $0x4] sm:$0xf]
        %v501 = vld [vmem:[%s498 + $0x8] sm:$0xf]
        %v502 = vld [vmem:[%s498 + $0xc] sm:$0xf]
        %v507 = vunpack.c.l.b16 %v499
        %v508 = vunpack.c.l.b16 %v500
        %v509 = vunpack.c.l.b16 %v501
        %v510 = vunpack.c.l.b16 %v502
        %v511 = vpack.c.b16 %v508, %v507
        %v512 = vpack.c.b16 %v510, %v509
        %vm515 = vcmask 261120
        %v517 = vsel %vm515, %v495, 0
        %519 = vmatprep.subr.bf16.mxu0 0
        %520 = vmatpush1.bf16.msra.mxu0 %v511
        %521 = vmatprep.subr.bf16.mxu0 0
        %522 = vmatpush1.bf16.msra.mxu0 %v512
        %523 = vmatprep.subr.bf16.mxu0 0
        %524 = vmatpush1.bf16.msra.mxu0 0
        %525 = vmatprep.subr.bf16.mxu0 0
        %526 = vmatpush1.bf16.msra.mxu0 0
        %527 = vmatprep.subr.bf16.mxu0 0
        %528 = vmatpush1.bf16.msra.mxu0 0
        %529 = vmatprep.subr.bf16.mxu0 0
        %530 = vmatpush1.bf16.msra.mxu0 0
        %531 = vmatprep.subr.bf16.mxu0 0
        %532 = vmatpush1.bf16.msra.mxu0 0
        %533 = vmatprep.subr.bf16.mxu0 0
        %534 = vmatpush1.bf16.msra.mxu0 0
        %535 = vmatprep.subr.bf16.mxu0 0
        %536 = vmatpush1.bf16.msra.mxu0 0
        %537 = vmatprep.subr.bf16.mxu0 0
        %538 = vmatpush1.bf16.msra.mxu0 0
        %539 = vmatprep.subr.bf16.mxu0 0
        %540 = vmatpush1.bf16.msra.mxu0 0
        %541 = vmatprep.subr.bf16.mxu0 0
        %542 = vmatpush1.bf16.msra.mxu0 0
        %543 = vmatprep.subr.bf16.mxu0 0
        %544 = vmatpush1.bf16.msra.mxu0 0
        %545 = vmatprep.subr.bf16.mxu0 0
        %546 = vmatpush1.bf16.msra.mxu0 0
        %547 = vmatprep.subr.bf16.mxu0 0
        %548 = vmatpush1.bf16.msra.mxu0 0
        %549 = vmatprep.subr.bf16.mxu0 0
        %550 = vmatpush1.bf16.msra.mxu0 0
        %551 = vmatprep.mubr.bf16.mxu0 0
        %552 = vmatmul.mubr.bf16.gmra.mrb[0].mxu0 %v517
        %v553 = vpop.f32.mrb[0].mxu0
        %v554 = vadd.f32 0.0, %v553
        %v555 = vpop.f32.mrb[0].mxu0
        %v556 = vpop.f32.mrb[0].mxu0
        %v557 = vpop.f32.mrb[0].mxu0
        %558 = vdwg.mxu0
        %v559 = vpack.c.bf16 %v554, %v554
        %s560 = smul.addr %s36, 4
        %s561 = scalar_lea.vmem [#allocation3], %s560
        %v562 = vld [vmem:[%s561] sm:$0xf]
        %s563 = smul.addr %s36, 4
        %s564 = scalar_lea.vmem [#allocation4], %s563
        %v565 = vld [vmem:[%s564] sm:$0xf]
        %s566 = smul.u32 %s35, 8
        %v567 = vlaneseq
        %v568 = vshrl.u32 %v567, 7
        %v569 = vstv %s566
        %v570 = vadd.s32 %v569, %v568
        %v571 = vlaneseq
        %v572 = vand.u32 %v571, 127
        %vm573 = vcmp.gt.s32.totalorder %v572, %v570
        %vm574 = vcmask 64512
        %v576 = vsel %vm574, %v559, 0
        %v579 = vsel %vm574, %v562, 0
        %581 = vmatprep.subr.bf16.mxu0 0
        %582 = vmatpush1.bf16.xpose.msra.mxu0 %v579
        %583 = vmatprep.subr.bf16.mxu0 0
        %584 = vmatpush1.bf16.xpose.msra.mxu0 0
        %585 = vmatprep.subr.bf16.mxu0 0
        %586 = vmatpush1.bf16.xpose.msra.mxu0 0
        %587 = vmatprep.subr.bf16.mxu0 0
        %588 = vmatpush1.bf16.xpose.msra.mxu0 0
        %589 = vmatprep.subr.bf16.mxu0 0
        %590 = vmatpush1.bf16.xpose.msra.mxu0 0
        %591 = vmatprep.subr.bf16.mxu0 0
        %592 = vmatpush1.bf16.xpose.msra.mxu0 0
        %593 = vmatprep.subr.bf16.mxu0 0
        %594 = vmatpush1.bf16.xpose.msra.mxu0 0
        %595 = vmatprep.subr.bf16.mxu0 0
        %596 = vmatpush1.bf16.xpose.msra.mxu0 0
        %597 = vmatprep.subr.bf16.mxu0 0
        %598 = vmatpush1.bf16.xpose.msra.mxu0 0
        %599 = vmatprep.subr.bf16.mxu0 0
        %600 = vmatpush1.bf16.xpose.msra.mxu0 0
        %601 = vmatprep.subr.bf16.mxu0 0
        %602 = vmatpush1.bf16.xpose.msra.mxu0 0
        %603 = vmatprep.subr.bf16.mxu0 0
        %604 = vmatpush1.bf16.xpose.msra.mxu0 0
        %605 = vmatprep.subr.bf16.mxu0 0
        %606 = vmatpush1.bf16.xpose.msra.mxu0 0
        %607 = vmatprep.subr.bf16.mxu0 0
        %608 = vmatpush1.bf16.xpose.msra.mxu0 0
        %609 = vmatprep.subr.bf16.mxu0 0
        %610 = vmatpush1.bf16.xpose.msra.mxu0 0
        %611 = vmatprep.subr.bf16.mxu0 0
        %612 = vmatpush1.bf16.xpose.msra.mxu0 0
        %613 = vmatprep.mubr.bf16.mxu0 0
        %614 = vmatmul.mubr.bf16.gmra.mrb[0].mxu0 %v576
        %v615 = vpop.f32.mrb[0].mxu0
        %v616 = vadd.f32 0.0, %v615
        %v617 = vpop.f32.mrb[0].mxu0
        %v618 = vpop.f32.mrb[0].mxu0
        %v619 = vpop.f32.mrb[0].mxu0
        %620 = vdwg.mxu0
        %v621 = vsel %vm573, -1e+30, %v616
        %v622 = vsel %vm574, %v621, -inf
        %623 = vmax.xlane.f32.xlu0 %v622
        %v624 = vpop.xlane.xlu0 %623
        %v625 = vsub.f32 %v621, %v624
        %v626 = vmul.f32 %v625, 1.442695
        %v627 = vpow.pop %v626
        %v628 = vsel %vm574, %v627, 0.0
        %629 = vadd.xlane.f32.xlu0 %v628
        %v630 = vpop.xlane.xlu0 %629
        %v631 = vrcp.pop %v630
        %v632 = vmul.f32 1.0, %v631
        %v633 = vmul.f32 %v627, %v632
        %634 = vst.msk [vmem:[%s360] sm:$0xff] %vm574, %v633
        %v635 = vpack.c.bf16 %v633, %v633
        %v637 = vsel %vm574, %v635, 0
        %vm639 = vcmask 1043456
        %v641 = vsel %vm639, %v565, 0
        %643 = vmatprep.subr.bf16.mxu0 0
        %644 = vmatpush1.bf16.msra.mxu0 %v641
        %645 = vmatprep.subr.bf16.mxu0 0
        %646 = vmatpush1.bf16.msra.mxu0 0
        %647 = vmatprep.subr.bf16.mxu0 0
        %648 = vmatpush1.bf16.msra.mxu0 0
        %649 = vmatprep.subr.bf16.mxu0 0
        %650 = vmatpush1.bf16.msra.mxu0 0
        %651 = vmatprep.subr.bf16.mxu0 0
        %652 = vmatpush1.bf16.msra.mxu0 0
        %653 = vmatprep.subr.bf16.mxu0 0
        %654 = vmatpush1.bf16.msra.mxu0 0
        %655 = vmatprep.subr.bf16.mxu0 0
        %656 = vmatpush1.bf16.msra.mxu0 0
        %657 = vmatprep.subr.bf16.mxu0 0
        %658 = vmatpush1.bf16.msra.mxu0 0
        %659 = vmatprep.subr.bf16.mxu0 0
        %660 = vmatpush1.bf16.msra.mxu0 0
        %661 = vmatprep.subr.bf16.mxu0 0
        %662 = vmatpush1.bf16.msra.mxu0 0
        %663 = vmatprep.subr.bf16.mxu0 0
        %664 = vmatpush1.bf16.msra.mxu0 0
        %665 = vmatprep.subr.bf16.mxu0 0
        %666 = vmatpush1.bf16.msra.mxu0 0
        %667 = vmatprep.subr.bf16.mxu0 0
        %668 = vmatpush1.bf16.msra.mxu0 0
        %669 = vmatprep.subr.bf16.mxu0 0
        %670 = vmatpush1.bf16.msra.mxu0 0
        %671 = vmatprep.subr.bf16.mxu0 0
        %672 = vmatpush1.bf16.msra.mxu0 0
        %673 = vmatprep.subr.bf16.mxu0 0
        %674 = vmatpush1.bf16.msra.mxu0 0
        %675 = vmatprep.mubr.bf16.mxu0 0
        %676 = vmatmul.mubr.bf16.gmra.mrb[0].mxu0 %v637
        %v677 = vpop.f32.mrb[0].mxu0
        %v678 = vadd.f32 0.0, %v677
        %v679 = vpop.f32.mrb[0].mxu0
        %v680 = vpop.f32.mrb[0].mxu0
        %v681 = vpop.f32.mrb[0].mxu0
        %682 = vdwg.mxu0
        %v683 = vpack.c.bf16 %v678, %v678
        %685 = vrot.lane.b32.xlu0 %v559, 120
        %v686 = vpop.permute.xlu0 %685
        %v688 = vunpack.c.l.b16 %v562
        %v689 = vpack.c.b16 %v688, %v688
        %690 = vrot.lane.b32.xlu0 %v689, 120
        %v691 = vpop.permute.xlu0 %690
        %v693 = vsel %vm574, %v686, 0
        %v696 = vsel %vm574, %v691, 0
        %698 = vmatprep.subr.bf16.mxu0 0
        %699 = vmatpush1.bf16.xpose.msra.mxu0 %v696
        %700 = vmatprep.subr.bf16.mxu0 0
        %701 = vmatpush1.bf16.xpose.msra.mxu0 0
        %702 = vmatprep.subr.bf16.mxu0 0
        %703 = vmatpush1.bf16.xpose.msra.mxu0 0
        %704 = vmatprep.subr.bf16.mxu0 0
        %705 = vmatpush1.bf16.xpose.msra.mxu0 0
        %706 = vmatprep.subr.bf16.mxu0 0
        %707 = vmatpush1.bf16.xpose.msra.mxu0 0
        %708 = vmatprep.subr.bf16.mxu0 0
        %709 = vmatpush1.bf16.xpose.msra.mxu0 0
        %710 = vmatprep.subr.bf16.mxu0 0
        %711 = vmatpush1.bf16.xpose.msra.mxu0 0
        %712 = vmatprep.subr.bf16.mxu0 0
        %713 = vmatpush1.bf16.xpose.msra.mxu0 0
        %714 = vmatprep.subr.bf16.mxu0 0
        %715 = vmatpush1.bf16.xpose.msra.mxu0 0
        %716 = vmatprep.subr.bf16.mxu0 0
        %717 = vmatpush1.bf16.xpose.msra.mxu0 0
        %718 = vmatprep.subr.bf16.mxu0 0
        %719 = vmatpush1.bf16.xpose.msra.mxu0 0
        %720 = vmatprep.subr.bf16.mxu0 0
        %721 = vmatpush1.bf16.xpose.msra.mxu0 0
        %722 = vmatprep.subr.bf16.mxu0 0
        %723 = vmatpush1.bf16.xpose.msra.mxu0 0
        %724 = vmatprep.subr.bf16.mxu0 0
        %725 = vmatpush1.bf16.xpose.msra.mxu0 0
        %726 = vmatprep.subr.bf16.mxu0 0
        %727 = vmatpush1.bf16.xpose.msra.mxu0 0
        %728 = vmatprep.subr.bf16.mxu0 0
        %729 = vmatpush1.bf16.xpose.msra.mxu0 0
        %730 = vmatprep.mubr.bf16.mxu0 0
        %731 = vmatmul.mubr.bf16.gmra.mrb[0].mxu0 %v693
        %v732 = vpop.f32.mrb[0].mxu0
        %v733 = vadd.f32 0.0, %v732
        %v734 = vpop.f32.mrb[0].mxu0
        %v735 = vpop.f32.mrb[0].mxu0
        %v736 = vpop.f32.mrb[0].mxu0
        %737 = vdwg.mxu0
        %v738 = vsel %vm573, -1e+30, %v733
        %v739 = vsel %vm574, %v738, -inf
        %740 = vmax.xlane.f32.xlu0 %v739
        %v741 = vpop.xlane.xlu0 %740
        %v742 = vsub.f32 %v738, %v741
        %v743 = vmul.f32 %v742, 1.442695
        %v744 = vpow.pop %v743
        %v745 = vsel %vm574, %v744, 0.0
        %746 = vadd.xlane.f32.xlu0 %v745
        %v747 = vpop.xlane.xlu0 %746
        %v748 = vrcp.pop %v747
        %v749 = vmul.f32 1.0, %v748
        %v750 = vmul.f32 %v744, %v749
        %s751 = scalar_lea.vmem %s360, 8 [#allocation15]
        %752 = vst.msk [vmem:[%s751] sm:$0xff] %vm574, %v750
        %v753 = vpack.c.bf16 %v750, %v750
        %v755 = vunpack.c.l.b16 %v565
        %v756 = vpack.c.b16 %v755, %v755
        %757 = vrot.lane.b32.xlu0 %v756, 120
        %v758 = vpop.permute.xlu0 %757
        %v760 = vsel %vm574, %v753, 0
        %v763 = vsel %vm639, %v758, 0
        %765 = vmatprep.subr.bf16.mxu0 0
        %766 = vmatpush1.bf16.msra.mxu0 %v763
        %767 = vmatprep.subr.bf16.mxu0 0
        %768 = vmatpush1.bf16.msra.mxu0 0
        %769 = vmatprep.subr.bf16.mxu0 0
        %770 = vmatpush1.bf16.msra.mxu0 0
        %771 = vmatprep.subr.bf16.mxu0 0
        %772 = vmatpush1.bf16.msra.mxu0 0
        %773 = vmatprep.subr.bf16.mxu0 0
        %774 = vmatpush1.bf16.msra.mxu0 0
        %775 = vmatprep.subr.bf16.mxu0 0
        %776 = vmatpush1.bf16.msra.mxu0 0
        %777 = vmatprep.subr.bf16.mxu0 0
        %778 = vmatpush1.bf16.msra.mxu0 0
        %779 = vmatprep.subr.bf16.mxu0 0
        %780 = vmatpush1.bf16.msra.mxu0 0
        %781 = vmatprep.subr.bf16.mxu0 0
        %782 = vmatpush1.bf16.msra.mxu0 0
        %783 = vmatprep.subr.bf16.mxu0 0
        %784 = vmatpush1.bf16.msra.mxu0 0
        %785 = vmatprep.subr.bf16.mxu0 0
        %786 = vmatpush1.bf16.msra.mxu0 0
        %787 = vmatprep.subr.bf16.mxu0 0
        %788 = vmatpush1.bf16.msra.mxu0 0
        %789 = vmatprep.subr.bf16.mxu0 0
        %790 = vmatpush1.bf16.msra.mxu0 0
        %791 = vmatprep.subr.bf16.mxu0 0
        %792 = vmatpush1.bf16.msra.mxu0 0
        %793 = vmatprep.subr.bf16.mxu0 0
        %794 = vmatpush1.bf16.msra.mxu0 0
        %795 = vmatprep.subr.bf16.mxu0 0
        %796 = vmatpush1.bf16.msra.mxu0 0
        %797 = vmatprep.mubr.bf16.mxu0 0
        %798 = vmatmul.mubr.bf16.gmra.mrb[0].mxu0 %v760
        %v799 = vpop.f32.mrb[0].mxu0
        %v800 = vadd.f32 0.0, %v799
        %v801 = vpop.f32.mrb[0].mxu0
        %v802 = vpop.f32.mrb[0].mxu0
        %v803 = vpop.f32.mrb[0].mxu0
        %804 = vdwg.mxu0
        %v805 = vpack.c.bf16 %v800, %v800
        %806 = vrot.lane.b32.xlu0 %v559, 112
        %v807 = vpop.permute.xlu0 %806
        %808 = vrot.lane.b32.xlu0 %v689, 112
        %v809 = vpop.permute.xlu0 %808
        %v811 = vsel %vm574, %v807, 0
        %v814 = vsel %vm574, %v809, 0
        %816 = vmatprep.subr.bf16.mxu0 0
        %817 = vmatpush1.bf16.xpose.msra.mxu0 %v814
        %818 = vmatprep.subr.bf16.mxu0 0
        %819 = vmatpush1.bf16.xpose.msra.mxu0 0
        %820 = vmatprep.subr.bf16.mxu0 0
        %821 = vmatpush1.bf16.xpose.msra.mxu0 0
        %822 = vmatprep.subr.bf16.mxu0 0
        %823 = vmatpush1.bf16.xpose.msra.mxu0 0
        %824 = vmatprep.subr.bf16.mxu0 0
        %825 = vmatpush1.bf16.xpose.msra.mxu0 0
        %826 = vmatprep.subr.bf16.mxu0 0
        %827 = vmatpush1.bf16.xpose.msra.mxu0 0
        %828 = vmatprep.subr.bf16.mxu0 0
        %829 = vmatpush1.bf16.xpose.msra.mxu0 0
        %830 = vmatprep.subr.bf16.mxu0 0
        %831 = vmatpush1.bf16.xpose.msra.mxu0 0
        %832 = vmatprep.subr.bf16.mxu0 0
        %833 = vmatpush1.bf16.xpose.msra.mxu0 0
        %834 = vmatprep.subr.bf16.mxu0 0
        %835 = vmatpush1.bf16.xpose.msra.mxu0 0
        %836 = vmatprep.subr.bf16.mxu0 0
        %837 = vmatpush1.bf16.xpose.msra.mxu0 0
        %838 = vmatprep.subr.bf16.mxu0 0
        %839 = vmatpush1.bf16.xpose.msra.mxu0 0
        %840 = vmatprep.subr.bf16.mxu0 0
        %841 = vmatpush1.bf16.xpose.msra.mxu0 0
        %842 = vmatprep.subr.bf16.mxu0 0
        %843 = vmatpush1.bf16.xpose.msra.mxu0 0
        %844 = vmatprep.subr.bf16.mxu0 0
        %845 = vmatpush1.bf16.xpose.msra.mxu0 0
        %846 = vmatprep.subr.bf16.mxu0 0
        %847 = vmatpush1.bf16.xpose.msra.mxu0 0
        %848 = vmatprep.mubr.bf16.mxu0 0
        %849 = vmatmul.mubr.bf16.gmra.mrb[0].mxu0 %v811
        %v850 = vpop.f32.mrb[0].mxu0
        %v851 = vadd.f32 0.0, %v850
        %v852 = vpop.f32.mrb[0].mxu0
        %v853 = vpop.f32.mrb[0].mxu0
        %v854 = vpop.f32.mrb[0].mxu0
        %855 = vdwg.mxu0
        %v856 = vsel %vm573, -1e+30, %v851
        %v857 = vsel %vm574, %v856, -inf
        %858 = vmax.xlane.f32.xlu0 %v857
        %v859 = vpop.xlane.xlu0 %858
        %v860 = vsub.f32 %v856, %v859
        %v861 = vmul.f32 %v860, 1.442695
        %v862 = vpow.pop %v861
        %v863 = vsel %vm574, %v862, 0.0
        %864 = vadd.xlane.f32.xlu0 %v863
        %v865 = vpop.xlane.xlu0 %864
        %v866 = vrcp.pop %v865
        %v867 = vmul.f32 1.0, %v866
        %v868 = vmul.f32 %v862, %v867
        %s869 = scalar_lea.vmem %s360, 16 [#allocation15]
        %870 = vst.msk [vmem:[%s869] sm:$0xff] %vm574, %v868
        %v871 = vpack.c.bf16 %v868, %v868
        %872 = vrot.lane.b32.xlu0 %v756, 112
        %v873 = vpop.permute.xlu0 %872
        %v875 = vsel %vm574, %v871, 0
        %v878 = vsel %vm639, %v873, 0
        %880 = vmatprep.subr.bf16.mxu0 0
        %881 = vmatpush1.bf16.msra.mxu0 %v878
        %882 = vmatprep.subr.bf16.mxu0 0
        %883 = vmatpush1.bf16.msra.mxu0 0
        %884 = vmatprep.subr.bf16.mxu0 0
        %885 = vmatpush1.bf16.msra.mxu0 0
        %886 = vmatprep.subr.bf16.mxu0 0
        %887 = vmatpush1.bf16.msra.mxu0 0
        %888 = vmatprep.subr.bf16.mxu0 0
        %889 = vmatpush1.bf16.msra.mxu0 0
        %890 = vmatprep.subr.bf16.mxu0 0
        %891 = vmatpush1.bf16.msra.mxu0 0
        %892 = vmatprep.subr.bf16.mxu0 0
        %893 = vmatpush1.bf16.msra.mxu0 0
        %894 = vmatprep.subr.bf16.mxu0 0
        %895 = vmatpush1.bf16.msra.mxu0 0
        %896 = vmatprep.subr.bf16.mxu0 0
        %897 = vmatpush1.bf16.msra.mxu0 0
        %898 = vmatprep.subr.bf16.mxu0 0
        %899 = vmatpush1.bf16.msra.mxu0 0
        %900 = vmatprep.subr.bf16.mxu0 0
        %901 = vmatpush1.bf16.msra.mxu0 0
        %902 = vmatprep.subr.bf16.mxu0 0
        %903 = vmatpush1.bf16.msra.mxu0 0
        %904 = vmatprep.subr.bf16.mxu0 0
        %905 = vmatpush1.bf16.msra.mxu0 0
        %906 = vmatprep.subr.bf16.mxu0 0
        %907 = vmatpush1.bf16.msra.mxu0 0
        %908 = vmatprep.subr.bf16.mxu0 0
        %909 = vmatpush1.bf16.msra.mxu0 0
        %910 = vmatprep.subr.bf16.mxu0 0
        %911 = vmatpush1.bf16.msra.mxu0 0
        %912 = vmatprep.mubr.bf16.mxu0 0
        %913 = vmatmul.mubr.bf16.gmra.mrb[0].mxu0 %v875
        %v914 = vpop.f32.mrb[0].mxu0
        %v915 = vadd.f32 0.0, %v914
        %v916 = vpop.f32.mrb[0].mxu0
        %v917 = vpop.f32.mrb[0].mxu0
        %v918 = vpop.f32.mrb[0].mxu0
        %919 = vdwg.mxu0
        %v920 = vpack.c.bf16 %v915, %v915
        %921 = vrot.lane.b32.xlu0 %v559, 104
        %v922 = vpop.permute.xlu0 %921
        %923 = vrot.lane.b32.xlu0 %v689, 104
        %v924 = vpop.permute.xlu0 %923
        %v926 = vsel %vm574, %v922, 0
        %v929 = vsel %vm574, %v924, 0
        %931 = vmatprep.subr.bf16.mxu0 0
        %932 = vmatpush1.bf16.xpose.msra.mxu0 %v929
        %933 = vmatprep.subr.bf16.mxu0 0
        %934 = vmatpush1.bf16.xpose.msra.mxu0 0
        %935 = vmatprep.subr.bf16.mxu0 0
        %936 = vmatpush1.bf16.xpose.msra.mxu0 0
        %937 = vmatprep.subr.bf16.mxu0 0
        %938 = vmatpush1.bf16.xpose.msra.mxu0 0
        %939 = vmatprep.subr.bf16.mxu0 0
        %940 = vmatpush1.bf16.xpose.msra.mxu0 0
        %941 = vmatprep.subr.bf16.mxu0 0
        %942 = vmatpush1.bf16.xpose.msra.mxu0 0
        %943 = vmatprep.subr.bf16.mxu0 0
        %944 = vmatpush1.bf16.xpose.msra.mxu0 0
        %945 = vmatprep.subr.bf16.mxu0 0
        %946 = vmatpush1.bf16.xpose.msra.mxu0 0
        %947 = vmatprep.subr.bf16.mxu0 0
        %948 = vmatpush1.bf16.xpose.msra.mxu0 0
        %949 = vmatprep.subr.bf16.mxu0 0
        %950 = vmatpush1.bf16.xpose.msra.mxu0 0
        %951 = vmatprep.subr.bf16.mxu0 0
        %952 = vmatpush1.bf16.xpose.msra.mxu0 0
        %953 = vmatprep.subr.bf16.mxu0 0
        %954 = vmatpush1.bf16.xpose.msra.mxu0 0
        %955 = vmatprep.subr.bf16.mxu0 0
        %956 = vmatpush1.bf16.xpose.msra.mxu0 0
        %957 = vmatprep.subr.bf16.mxu0 0
        %958 = vmatpush1.bf16.xpose.msra.mxu0 0
        %959 = vmatprep.subr.bf16.mxu0 0
        %960 = vmatpush1.bf16.xpose.msra.mxu0 0
        %961 = vmatprep.subr.bf16.mxu0 0
        %962 = vmatpush1.bf16.xpose.msra.mxu0 0
        %963 = vmatprep.mubr.bf16.mxu0 0
        %964 = vmatmul.mubr.bf16.gmra.mrb[0].mxu0 %v926
        %v965 = vpop.f32.mrb[0].mxu0
        %v966 = vadd.f32 0.0, %v965
        %v967 = vpop.f32.mrb[0].mxu0
        %v968 = vpop.f32.mrb[0].mxu0
        %v969 = vpop.f32.mrb[0].mxu0
        %970 = vdwg.mxu0
        %v971 = vsel %vm573, -1e+30, %v966
        %v972 = vsel %vm574, %v971, -inf
        %973 = vmax.xlane.f32.xlu0 %v972
        %v974 = vpop.xlane.xlu0 %973
        %v975 = vsub.f32 %v971, %v974
        %v976 = vmul.f32 %v975, 1.442695
        %v977 = vpow.pop %v976
        %v978 = vsel %vm574, %v977, 0.0
        %979 = vadd.xlane.f32.xlu0 %v978
        %v980 = vpop.xlane.xlu0 %979
        %v981 = vrcp.pop %v980
        %v982 = vmul.f32 1.0, %v981
        %v983 = vmul.f32 %v977, %v982
        %s984 = scalar_lea.vmem %s360, 24 [#allocation15]
        %985 = vst.msk [vmem:[%s984] sm:$0xff] %vm574, %v983
        %v986 = vpack.c.bf16 %v983, %v983
        %987 = vrot.lane.b32.xlu0 %v756, 104
        %v988 = vpop.permute.xlu0 %987
        %v990 = vsel %vm574, %v986, 0
        %v993 = vsel %vm639, %v988, 0
        %995 = vmatprep.subr.bf16.mxu0 0
        %996 = vmatpush1.bf16.msra.mxu0 %v993
        %997 = vmatprep.subr.bf16.mxu0 0
        %998 = vmatpush1.bf16.msra.mxu0 0
        %999 = vmatprep.subr.bf16.mxu0 0
        %1000 = vmatpush1.bf16.msra.mxu0 0
        %1001 = vmatprep.subr.bf16.mxu0 0
        %1002 = vmatpush1.bf16.msra.mxu0 0
        %1003 = vmatprep.subr.bf16.mxu0 0
        %1004 = vmatpush1.bf16.msra.mxu0 0
        %1005 = vmatprep.subr.bf16.mxu0 0
        %1006 = vmatpush1.bf16.msra.mxu0 0
        %1007 = vmatprep.subr.bf16.mxu0 0
        %1008 = vmatpush1.bf16.msra.mxu0 0
        %1009 = vmatprep.subr.bf16.mxu0 0
        %1010 = vmatpush1.bf16.msra.mxu0 0
        %1011 = vmatprep.subr.bf16.mxu0 0
        %1012 = vmatpush1.bf16.msra.mxu0 0
        %1013 = vmatprep.subr.bf16.mxu0 0
        %1014 = vmatpush1.bf16.msra.mxu0 0
        %1015 = vmatprep.subr.bf16.mxu0 0
        %1016 = vmatpush1.bf16.msra.mxu0 0
        %1017 = vmatprep.subr.bf16.mxu0 0
        %1018 = vmatpush1.bf16.msra.mxu0 0
        %1019 = vmatprep.subr.bf16.mxu0 0
        %1020 = vmatpush1.bf16.msra.mxu0 0
        %1021 = vmatprep.subr.bf16.mxu0 0
        %1022 = vmatpush1.bf16.msra.mxu0 0
        %1023 = vmatprep.subr.bf16.mxu0 0
        %1024 = vmatpush1.bf16.msra.mxu0 0
        %1025 = vmatprep.subr.bf16.mxu0 0
        %1026 = vmatpush1.bf16.msra.mxu0 0
        %1027 = vmatprep.mubr.bf16.mxu0 0
        %1028 = vmatmul.mubr.bf16.gmra.mrb[0].mxu0 %v990
        %v1029 = vpop.f32.mrb[0].mxu0
        %v1030 = vadd.f32 0.0, %v1029
        %v1031 = vpop.f32.mrb[0].mxu0
        %v1032 = vpop.f32.mrb[0].mxu0
        %v1033 = vpop.f32.mrb[0].mxu0
        %1034 = vdwg.mxu0
        %v1035 = vpack.c.bf16 %v1030, %v1030
        %1037 = vrot.lane.b32.xlu0 %v805, 8
        %v1038 = vpop.permute.xlu0 %1037
        %1040 = vrot.lane.b32.xlu0 %v920, 16
        %v1041 = vpop.permute.xlu0 %1040
        %1043 = vrot.lane.b32.xlu0 %v1035, 24
        %v1044 = vpop.permute.xlu0 %1043
        %v1047 = vsel %vm574, %v683, %v1038
        %vm1048 = vcmask 130048
        %v1050 = vsel %vm1048, %v1047, %v1041
        %vm1051 = vcmask 195584
        %v1053 = vsel %vm1051, %v1050, %v1044
        // Predicated region
        $region65: #{tpu_custom_call.1} parent=39 // pred_check
          %p1054 = pneg %p364
        $region66: #{tpu_custom_call.1} parent=39 // pred_check_branch
          %1056 = sbr.rel (%p1054) target = $region68
        $region67: #{tpu_custom_call.1} parent=39 // pred_region
          %1057 = vst.msk [vmem:[%s353] sm:$0xff] %vm515, 0.0
        $region68: #{tpu_custom_call.1} parent=39 // pred_fallthru
          _
        %v1058 = vld [vmem:[%s353] sm:$0xff]
        %s1059 = smul.addr %s496, 4
        %s1060 = scalar_lea.vmem [#allocation13], %s1059
        %v1061 = vld [vmem:[%s1060] sm:$0xf]
        %v1062 = vld [vmem:[%s1060 + $0x4] sm:$0xf]
        %v1063 = vld [vmem:[%s1060 + $0x8] sm:$0xf]
        %v1064 = vld [vmem:[%s1060 + $0xc] sm:$0xf]
        %v1069 = vunpack.c.l.b16 %v1061
        %v1070 = vunpack.c.l.b16 %v1062
        %v1071 = vunpack.c.l.b16 %v1063
        %v1072 = vunpack.c.l.b16 %v1064
        %v1073 = vpack.c.b16 %v1070, %v1069
        %v1074 = vpack.c.b16 %v1072, %v1071
        %v1077 = vsel %vm515, %v1053, 0
        %1079 = vmatprep.subr.bf16.mxu0 0
        %1080 = vmatpush1.bf16.msra.mxu0 %v1073
        %1081 = vmatprep.subr.bf16.mxu0 0
        %1082 = vmatpush1.bf16.msra.mxu0 %v1074
        %1083 = vmatprep.subr.bf16.mxu0 0
        %1084 = vmatpush1.bf16.msra.mxu0 0
        %1085 = vmatprep.subr.bf16.mxu0 0
        %1086 = vmatpush1.bf16.msra.mxu0 0
        %1087 = vmatprep.subr.bf16.mxu0 0
        %1088 = vmatpush1.bf16.msra.mxu0 0
        %1089 = vmatprep.subr.bf16.mxu0 0
        %1090 = vmatpush1.bf16.msra.mxu0 0
        %1091 = vmatprep.subr.bf16.mxu0 0
        %1092 = vmatpush1.bf16.msra.mxu0 0
        %1093 = vmatprep.subr.bf16.mxu0 0
        %1094 = vmatpush1.bf16.msra.mxu0 0
        %1095 = vmatprep.subr.bf16.mxu0 0
        %1096 = vmatpush1.bf16.msra.mxu0 0
        %1097 = vmatprep.subr.bf16.mxu0 0
        %1098 = vmatpush1.bf16.msra.mxu0 0
        %1099 = vmatprep.subr.bf16.mxu0 0
        %1100 = vmatpush1.bf16.msra.mxu0 0
        %1101 = vmatprep.subr.bf16.mxu0 0
        %1102 = vmatpush1.bf16.msra.mxu0 0
        %1103 = vmatprep.subr.bf16.mxu0 0
        %1104 = vmatpush1.bf16.msra.mxu0 0
        %1105 = vmatprep.subr.bf16.mxu0 0
        %1106 = vmatpush1.bf16.msra.mxu0 0
        %1107 = vmatprep.subr.bf16.mxu0 0
        %1108 = vmatpush1.bf16.msra.mxu0 0
        %1109 = vmatprep.subr.bf16.mxu0 0
        %1110 = vmatpush1.bf16.msra.mxu0 0
        %1111 = vmatprep.mubr.bf16.mxu0 0
        %1112 = vmatmul.mubr.bf16.gmra.mrb[0].mxu0 %v1077
        %v1113 = vpop.f32.mrb[0].mxu0
        %v1114 = vadd.f32 0.0, %v1113
        %v1115 = vpop.f32.mrb[0].mxu0
        %v1116 = vpop.f32.mrb[0].mxu0
        %v1117 = vpop.f32.mrb[0].mxu0
        %1118 = vdwg.mxu0
        %v1119 = vadd.f32 %v1058, %v1114
        %1120 = vst.msk [vmem:[%s353] sm:$0xff] %vm515, %v1119
        %s1121 = sand.u32 %s168, 1
        %s1122 = scalar_lea.sflag [#allocation7], %s1121
        %s1123 = sand.u32 %s168, 1
        %s1124 = smul.addr %s1123, 8
        %s1125 = scalar_lea.vmem [#allocation14], %s1124
        %s1126 = sand.u32 %s198, 1
        %s1127 = scalar_lea.sflag [#allocation16], %s1126
        %s1128 = sand.u32 %s198, 1
        %s1129 = smul.addr %s1128, 32
        %s1130 = scalar_lea.vmem [#allocation15], %s1129
        // Predicated region
        $region69: #{tpu_custom_call.1} parent=39 // pred_check
          %p1131 = pneg %p178
        $region70: #{tpu_custom_call.1} parent=39 // pred_check_branch
          %1133 = sbr.rel (%p1131) target = $region72
        $region71: #{tpu_custom_call.1} parent=39 // pred_region
          %s1135 = ssub.s32 128, 128
          %1136 = vsyncadd %s1122, %s1135
          %s1137 = sadd.s32 %s35, %s34
          %s1138 = smul.addr %s1137, 128
          %s1139 = scalar_lea.hbm %s5, %s1138
          %s1141 = sshll.u32 %s1125, 4
          %s1142 = int_to_ptr.vmem [resolvable:$true] %s1141
          %1144 = dma.vmem_to_hbm [thread:$0]  %s1142, 128, %s1139, %s1122
        $region72: #{tpu_custom_call.1} parent=39 // pred_fallthru
          _
        // Predicated region
        $region73: #{tpu_custom_call.1} parent=39 // pred_check
          %p1145 = pneg %p208
        $region74: #{tpu_custom_call.1} parent=39 // pred_check_branch
          %1147 = sbr.rel (%p1145) target = $region76
        $region75: #{tpu_custom_call.1} parent=39 // pred_region
          %s1148 = smul.u32 4, %s36
          %s1150 = ssub.s32 512, 512
          %1151 = vsyncadd %s1127, %s1150
          %s1152 = sadd.s32 %s35, %s1148
          %s1153 = smul.addr %s34, 4
          %s1154 = sadd.s32 %s1152, %s1153
          %s1155 = smul.addr %s1154, 128
          %s1156 = scalar_lea.hbm %s6, %s1155
          %s1157 = sshll.u32 %s1130, 4
          %s1158 = int_to_ptr.vmem [resolvable:$true] %s1157
          %1163 = dma.vmem_to_hbm [thread:$0]  %s1158, 512, %s1156, %s1127, 128, 128, 8
        $region76: #{tpu_custom_call.1} parent=39 // pred_fallthru
          _
      $region40: #{tpu_custom_call.1} parent=5 // pred_fallthru
        _
      %p1164 = scmp.le.s32.totalorder 2, %s24
      // Predicated region
      $region77: #{tpu_custom_call.1} parent=5 // pred_check
        %p1165 = pneg %p1164
      $region78: #{tpu_custom_call.1} parent=5 // pred_check_branch
        %1167 = sbr.rel (%p1165) target = $region80
      $region79: #{tpu_custom_call.1} parent=5 // pred_region
        %s1168 = ssub.s32 %s24, 2
        // Predicated region
        $region81: #{tpu_custom_call.1} parent=79 // pred_check
          %p1169 = pneg %p184
        $region82: #{tpu_custom_call.1} parent=79 // pred_check_branch
          %1171 = sbr.rel (%p1169) target = $region84
        $region83: #{tpu_custom_call.1} parent=79 // pred_region
          %s1172 = sand.u32 %s169, 1
          %s1173 = scalar_lea.sflag [#allocation7], %s1172
          %s1174 = sand.u32 %s169, 1
          %s1175 = smul.addr %s1174, 8
          %s1176 = scalar_lea.vmem [#allocation14], %s1175
          %1177 = dma.done %s1173, 128
        $region84: #{tpu_custom_call.1} parent=79 // pred_fallthru
          _
        // Predicated region
        $region85: #{tpu_custom_call.1} parent=79 // pred_check
          %p1178 = pneg %p214
        $region86: #{tpu_custom_call.1} parent=79 // pred_check_branch
          %1180 = sbr.rel (%p1178) target = $region88
        $region87: #{tpu_custom_call.1} parent=79 // pred_region
          %s1181 = sand.u32 %s199, 1
          %s1182 = scalar_lea.sflag [#allocation16], %s1181
          %s1183 = sand.u32 %s199, 1
          %s1184 = smul.addr %s1183, 32
          %s1185 = scalar_lea.vmem [#allocation15], %s1184
          %1186 = dma.done %s1182, 512
        $region88: #{tpu_custom_call.1} parent=79 // pred_fallthru
          _
      $region80: #{tpu_custom_call.1} parent=5 // pred_fallthru
        _
    $region6: #{tpu_custom_call.1} parent=1 // loop_footer
      %s28 = sadd.s32 1, %s24
    $region7: #{tpu_custom_call.1} parent=1 // loop_footer_branch
      %23 = sbr.rel target = $region3
    $region8: #{tpu_custom_call.1} parent=1 // loop_exit
      _
    %1187 = vsyncpa [#allocation6], 1
    %s1188 = scalar_lea.sflag [#allocation6], 1
    %1189 = vsyncpa %s1188, 1
    %1190 = vsyncpa [#allocation9], 1
    %1191 = vsyncpa [#allocation12], 1
    %1192 = vsyncpa [#allocation7], 1
    %s1193 = scalar_lea.sflag [#allocation7], 1
    %1194 = vsyncpa %s1193, 1
    %1195 = vsyncpa [#allocation16], 1
    %s1196 = scalar_lea.sflag [#allocation16], 1
    %1197 = vsyncpa %s1196, 1

</llo_original>
